<compile_context>
chip_gen: v5e
topology: v5e:2x2
jax: 0.10.0
libtpu: 0.0.40
codegen_flags: <defaults>
</compile_context>

<pallas_src>
import numpy as np

import jax
import jax.numpy as jnp
from jax.experimental import pallas as pl
from jax.experimental.pallas import tpu as pltpu


# --------------------------------------------------------------------------- #
# Constant 0/1 operators (numpy -> baked into the program as constants)
# --------------------------------------------------------------------------- #
def _shift_operator(h, w, di, dj):
    """(h*w, h*w) matrix M with (x_flat @ M)[t] = x[ti+di, tj+dj] (zero outside)."""
    hw = h * w
    t = np.arange(hw)
    ti, tj = t // w, t % w
    si, sj = ti + di, tj + dj
    valid = (si >= 0) & (si < h) & (sj >= 0) & (sj < w)
    src = si * w + sj
    s = np.arange(hw)
    return ((s[:, None] == src[None, :]) & valid[None, :]).astype(np.float32)


def _pool_operator(h, w, a, b):
    """(h*w, (h//2)*(w//2)) selector: (x_flat @ M)[t'] = x[2i'+a, 2j'+b]."""
    ho, wo = h // 2, w // 2
    t = np.arange(ho * wo)
    src = (2 * (t // wo) + a) * w + (2 * (t % wo) + b)
    s = np.arange(h * w)
    return (s[:, None] == src[None, :]).astype(np.float32)


# --------------------------------------------------------------------------- #
# Fused Pallas kernel: conv1 -> relu1 -> pool1 -> conv2 -> relu2 -> pool2 -> fc
# --------------------------------------------------------------------------- #
def _fused_kernel(patches1_ref, w1_ref, b1_ref, p1sel_ref,
                  w2_ref, b2_ref, s2_ref, p2sel_ref,
                  wfc_ref, bfc_ref,
                  relu1_ref, pool2_ref, fc_ref):
    f32 = jnp.float32

    # ---- conv1 + bias + ReLU: (8, 256), lane-dense (H*W on the 128-lane axis) ----
    a1 = jnp.dot(w1_ref[...], patches1_ref[...], preferred_element_type=f32)  # (8,36)@(36,256)
    a1 = jnp.maximum(a1 + b1_ref[...], 0.0)
    relu1_ref[...] = a1                                                       # extracted 'relu1'

    # ---- pool1: 2x2 max = max over 4 exact phase selections (MXU gathers) -> (8, 64)
    p1 = jnp.dot(a1, p1sel_ref[0], preferred_element_type=f32)
    for k in range(1, 4):
        p1 = jnp.maximum(p1, jnp.dot(a1, p1sel_ref[k], preferred_element_type=f32))

    # ---- conv2: 9 accumulated (16,8)@(8,64) matmuls; the 3x3 spatial shifts are
    #      matmuls against constant 0/1 shift operators (input stays VMEM-resident).
    acc2 = jnp.dot(w2_ref[0],
                   jnp.dot(p1, s2_ref[0], preferred_element_type=f32),
                   preferred_element_type=f32)
    for k in range(1, 9):
        shifted = jnp.dot(p1, s2_ref[k], preferred_element_type=f32)          # (8, 64)
        acc2 = acc2 + jnp.dot(w2_ref[k], shifted, preferred_element_type=f32)  # (16, 64)
    a2 = jnp.maximum(acc2 + b2_ref[...], 0.0)                                  # relu2 (16, 64)

    # ---- pool2 -> (16, 16)
    p2 = jnp.dot(a2, p2sel_ref[0], preferred_element_type=f32)
    for k in range(1, 4):
        p2 = jnp.maximum(p2, jnp.dot(a2, p2sel_ref[k], preferred_element_type=f32))
    pool2_ref[...] = p2                                                        # extracted 'pool2'

    # ---- fc as a lane-dense multiply + reduce (VPU/XLU), avoiding a (1,32) MXU matmul.
    #      wfc[n, c, t] = fc_w[n, c*16 + t]  matches PyTorch's x.view(1, -1) flatten order.
    prod = wfc_ref[...] * p2[None, :, :]                                       # (32, 16, 16)
    fc_ref[...] = bfc_ref[...] + jnp.sum(jnp.sum(prod, axis=-1), axis=-1, keepdims=True)


# --------------------------------------------------------------------------- #
# FeatureExtractor equivalent
# --------------------------------------------------------------------------- #
_CHILD_ORDER = ("conv1", "relu1", "pool1", "conv2", "relu2", "pool2", "fc")
_KERNEL_OUTPUTS = ("relu1", "pool2", "fc")


def make_submodule_params(key):
    ks = jax.random.split(key, 6)
    return {
        "conv1_w": 0.1 * jax.random.normal(ks[0], (8, 4, 3, 3), jnp.float32),
        "conv1_b": 0.1 * jax.random.normal(ks[1], (8,), jnp.float32),
        "conv2_w": 0.1 * jax.random.normal(ks[2], (16, 8, 3, 3), jnp.float32),
        "conv2_b": 0.1 * jax.random.normal(ks[3], (16,), jnp.float32),
        "fc_w":    0.1 * jax.random.normal(ks[4], (32, 16 * 4 * 4), jnp.float32),
        "fc_b":    0.1 * jax.random.normal(ks[5], (32,), jnp.float32),
    }


def feature_extractor_forward(x_nchw, params, extracted_layers=("relu1", "pool2", "fc")):
    """Mirrors FeatureExtractor.forward for the concrete submodule above.

    x_nchw: (1, 4, 16, 16) float32 (batch must be 1: the module does x.view(1, -1) before fc).
    Returns the extracted outputs in child-iteration order (PyTorch NCHW shapes, N=1 kept).
    """
    assert x_nchw.shape == (1, 4, 16, 16), "batch must be 1 (module flattens with x.view(1, -1))"
    for name in extracted_layers:
        if name not in _KERNEL_OUTPUTS:
            # TODO(synk): other child layers (conv1/pool1/conv2/relu2) are computed inside the
            # fused kernel but not wired out as kernel outputs; add outputs here if needed.
            raise NotImplementedError(f"extraction of layer {name!r} not wired out of the fused kernel")

    C1, H1, W1 = 4, 16, 16      # conv1 input
    H2, W2 = 8, 8               # after pool1
    H3, W3 = 4, 4               # after pool2

    # --- cheap outside prep: conv1's 9 shifted input copies (36 KiB), weight reshapes ---
    x3 = x_nchw[0]                                            # (4, 16, 16)
    xp = jnp.pad(x3, ((0, 0), (1, 1), (1, 1)))
    patches1 = jnp.concatenate(
        [xp[:, u:u + H1, v:v + W1].reshape(C1, H1 * W1) for u in range(3) for v in range(3)],
        axis=0)                                               # (36, 256), row = (u*3+v)*4 + ci

    w1m = params["conv1_w"].transpose(0, 2, 3, 1).reshape(8, 36)    # [co, (u,v,ci)]
    b1 = params["conv1_b"].reshape(8, 1)
    w2r = params["conv2_w"].transpose(2, 3, 0, 1).reshape(9, 16, 8)  # [u*3+v, co, ci]
    b2 = params["conv2_b"].reshape(16, 1)
    wfc3 = params["fc_w"].reshape(32, 16, 16)                        # [n, c, h*4+w]
    bfc = params["fc_b"].reshape(32, 1)

    # --- constant gather operators (compile-time constants) ---
    p1sel = jnp.asarray(np.stack([_pool_operator(H1, W1, a, b) for a in (0, 1) for b in (0, 1)]))  # (4,256,64)
    s2 = jnp.asarray(np.stack([_shift_operator(H2, W2, u - 1, v - 1)
                               for u in range(3) for v in range(3)]))                              # (9,64,64)
    p2sel = jnp.asarray(np.stack([_pool_operator(H2, W2, a, b) for a in (0, 1) for b in (0, 1)]))  # (4,64,16)

    vmem = pl.BlockSpec(memory_space=pltpu.MemorySpace.VMEM)
    relu1_2d, pool2_2d, fc_col = pl.pallas_call(
        _fused_kernel,
        out_shape=(
            jax.ShapeDtypeStruct((8, H1 * W1), jnp.float32),   # relu1 as (C, H*W), lane-dense
            jax.ShapeDtypeStruct((16, H3 * W3), jnp.float32),  # pool2 as (C, H*W)
            jax.ShapeDtypeStruct((32, 1), jnp.float32),        # fc as a column
        ),
        in_specs=[vmem] * 10,
        out_specs=(vmem, vmem, vmem),
    )(patches1, w1m, b1, p1sel, w2r, b2, s2, p2sel, wfc3, bfc)

    results = {
        "relu1": relu1_2d.reshape(1, 8, 16, 16),
        "pool2": pool2_2d.reshape(1, 16, 4, 4),
        "fc": fc_col.reshape(1, 32),
    }
    return [results[name] for name in _CHILD_ORDER if name in extracted_layers]


# --------------------------------------------------------------------------- #
# Pure-JAX reference (for numerical verification only)
# --------------------------------------------------------------------------- #
def reference_forward(x_nchw, params):
    hi = jax.lax.Precision.HIGHEST

    def conv(t, w, b):
        y = jax.lax.conv_general_dilated(
            t, w, window_strides=(1, 1), padding=((1, 1), (1, 1)),
            dimension_numbers=("NCHW", "OIHW", "NCHW"), precision=hi)
        return y + b.reshape(1, -1, 1, 1)

    def pool(t):
        return jax.lax.reduce_window(t, -jnp.inf, jax.lax.max,
                                     (1, 1, 2, 2), (1, 1, 2, 2), "VALID")

    a1 = jnp.maximum(conv(x_nchw, params["conv1_w"], params["conv1_b"]), 0.0)
    p1 = pool(a1)
    a2 = jnp.maximum(conv(p1, params["conv2_w"], params["conv2_b"]), 0.0)
    p2 = pool(a2)
    fc = jnp.dot(p2.reshape(1, -1), params["fc_w"].T, precision=hi) + params["fc_b"][None, :]
    return [a1, p2, fc]


if __name__ == "__main__":
    key = jax.random.PRNGKey(0)
    k_in, k_params = jax.random.split(key)

    x = jax.random.normal(k_in, (1, 4, 16, 16), jnp.float32)  # NCHW, batch=1 (fc does x.view(1,-1))
    params = make_submodule_params(k_params)
    extracted_layers = ("relu1", "pool2", "fc")

    fwd = jax.jit(feature_extractor_forward, static_argnames=("extracted_layers",))
    outs = fwd(x, params, extracted_layers=extracted_layers)
    outs = [jax.block_until_ready(o) for o in outs]

    expected_shapes = [(1, 8, 16, 16), (1, 16, 4, 4), (1, 32)]
    assert [tuple(o.shape) for o in outs] == expected_shapes, \
        f"unexpected shapes: {[o.shape for o in outs]}"

    refs = reference_forward(x, params)
    for name, got, ref in zip(extracted_layers, outs, refs):
        assert bool(jnp.isfinite(got).all()), f"{name}: non-finite output"
        err = float(jnp.max(jnp.abs(got - ref)))
        assert err < 2e-2, f"{name}: max abs error vs reference = {err}"

    print("KERNEL_OK")
</pallas_src>

<mosaic_0001>
module attributes {stable_mosaic.version = 11 : i64} {
  func.func @_fused_kernel(%arg0: memref<36x256xf32, #tpu.memory_space<vmem>>, %arg1: memref<8x36xf32, #tpu.memory_space<vmem>>, %arg2: memref<8x1xf32, #tpu.memory_space<vmem>>, %arg3: memref<4x256x64xf32, #tpu.memory_space<vmem>>, %arg4: memref<9x16x8xf32, #tpu.memory_space<vmem>>, %arg5: memref<16x1xf32, #tpu.memory_space<vmem>>, %arg6: memref<9x64x64xf32, #tpu.memory_space<vmem>>, %arg7: memref<4x64x16xf32, #tpu.memory_space<vmem>>, %arg8: memref<32x16x16xf32, #tpu.memory_space<vmem>>, %arg9: memref<32x1xf32, #tpu.memory_space<vmem>>, %arg10: memref<8x256xf32, #tpu.memory_space<vmem>>, %arg11: memref<16x16xf32, #tpu.memory_space<vmem>>, %arg12: memref<32x1xf32, #tpu.memory_space<vmem>>) attributes {dimension_semantics = [], scalar_prefetch = 0 : i64, scratch_operands = 0 : i64, tpu.core_type = #tpu.core_type<tc>} {
    %c0 = arith.constant 0 : index
    %c0_0 = arith.constant 0 : index
    %0 = vector.load %arg1[%c0, %c0_0] : memref<8x36xf32, #tpu.memory_space<vmem>>, vector<8x36xf32>
    %c0_1 = arith.constant 0 : index
    %c0_2 = arith.constant 0 : index
    %1 = vector.load %arg0[%c0_1, %c0_2] : memref<36x256xf32, #tpu.memory_space<vmem>>, vector<36x256xf32>
    %cst = arith.constant dense<0.000000e+00> : vector<8x256xf32>
    %2 = tpu.matmul %0, %1, %cst {dimension_numbers = #tpu.dot_dimension_numbers<[1], [0], [0], [1], [0, 0, 1, 1], [], []>} : vector<8x36xf32>, vector<36x256xf32>, vector<8x256xf32> -> vector<8x256xf32>
    %c0_3 = arith.constant 0 : index
    %c0_4 = arith.constant 0 : index
    %3 = vector.load %arg2[%c0_3, %c0_4] : memref<8x1xf32, #tpu.memory_space<vmem>>, vector<8x1xf32>
    %4 = vector.broadcast %3 : vector<8x1xf32> to vector<8x256xf32>
    %5 = arith.addf %2, %4 : vector<8x256xf32>
    %cst_5 = arith.constant 0.000000e+00 : f32
    %6 = vector.broadcast %cst_5 : f32 to vector<8x256xf32>
    %7 = arith.maximumf %5, %6 : vector<8x256xf32>
    %c0_6 = arith.constant 0 : index
    %c0_7 = arith.constant 0 : index
    %8 = vector.load %arg10[%c0_6, %c0_7] : memref<8x256xf32, #tpu.memory_space<vmem>>, vector<8x256xf32>
    tpu.vector_store %arg10[%c0_6, %c0_7], %7 {strides = array<i32>} : memref<8x256xf32, #tpu.memory_space<vmem>>, vector<8x256xf32>,
    %c0_8 = arith.constant 0 : index
    %c0_9 = arith.constant 0 : index
    %c0_10 = arith.constant 0 : index
    %9 = vector.load %arg3[%c0_8, %c0_9, %c0_10] : memref<4x256x64xf32, #tpu.memory_space<vmem>>, vector<1x256x64xf32>
    %10 = vector.shape_cast %9 : vector<1x256x64xf32> to vector<256x64xf32>
    %cst_11 = arith.constant dense<0.000000e+00> : vector<8x64xf32>
    %11 = tpu.matmul %7, %10, %cst_11 {dimension_numbers = #tpu.dot_dimension_numbers<[1], [0], [0], [1], [0, 0, 1, 1], [], []>} : vector<8x256xf32>, vector<256x64xf32>, vector<8x64xf32> -> vector<8x64xf32>
    %c1 = arith.constant 1 : index
    %c0_12 = arith.constant 0 : index
    %c0_13 = arith.constant 0 : index
    %12 = vector.load %arg3[%c1, %c0_12, %c0_13] : memref<4x256x64xf32, #tpu.memory_space<vmem>>, vector<1x256x64xf32>
    %13 = vector.shape_cast %12 : vector<1x256x64xf32> to vector<256x64xf32>
    %cst_14 = arith.constant dense<0.000000e+00> : vector<8x64xf32>
    %14 = tpu.matmul %7, %13, %cst_14 {dimension_numbers = #tpu.dot_dimension_numbers<[1], [0], [0], [1], [0, 0, 1, 1], [], []>} : vector<8x256xf32>, vector<256x64xf32>, vector<8x64xf32> -> vector<8x64xf32>
    %15 = arith.maximumf %11, %14 : vector<8x64xf32>
    %c2 = arith.constant 2 : index
    %c0_15 = arith.constant 0 : index
    %c0_16 = arith.constant 0 : index
    %16 = vector.load %arg3[%c2, %c0_15, %c0_16] : memref<4x256x64xf32, #tpu.memory_space<vmem>>, vector<1x256x64xf32>
    %17 = vector.shape_cast %16 : vector<1x256x64xf32> to vector<256x64xf32>
    %cst_17 = arith.constant dense<0.000000e+00> : vector<8x64xf32>
    %18 = tpu.matmul %7, %17, %cst_17 {dimension_numbers = #tpu.dot_dimension_numbers<[1], [0], [0], [1], [0, 0, 1, 1], [], []>} : vector<8x256xf32>, vector<256x64xf32>, vector<8x64xf32> -> vector<8x64xf32>
    %19 = arith.maximumf %15, %18 : vector<8x64xf32>
    %c3 = arith.constant 3 : index
    %c0_18 = arith.constant 0 : index
    %c0_19 = arith.constant 0 : index
    %20 = vector.load %arg3[%c3, %c0_18, %c0_19] : memref<4x256x64xf32, #tpu.memory_space<vmem>>, vector<1x256x64xf32>
    %21 = vector.shape_cast %20 : vector<1x256x64xf32> to vector<256x64xf32>
    %cst_20 = arith.constant dense<0.000000e+00> : vector<8x64xf32>
    %22 = tpu.matmul %7, %21, %cst_20 {dimension_numbers = #tpu.dot_dimension_numbers<[1], [0], [0], [1], [0, 0, 1, 1], [], []>} : vector<8x256xf32>, vector<256x64xf32>, vector<8x64xf32> -> vector<8x64xf32>
    %23 = arith.maximumf %19, %22 : vector<8x64xf32>
    %c0_21 = arith.constant 0 : index
    %c0_22 = arith.constant 0 : index
    %c0_23 = arith.constant 0 : index
    %24 = vector.load %arg4[%c0_21, %c0_22, %c0_23] : memref<9x16x8xf32, #tpu.memory_space<vmem>>, vector<1x16x8xf32>
    %25 = vector.shape_cast %24 : vector<1x16x8xf32> to vector<16x8xf32>
    %c0_24 = arith.constant 0 : index
    %c0_25 = arith.constant 0 : index
    %c0_26 = arith.constant 0 : index
    %26 = vector.load %arg6[%c0_24, %c0_25, %c0_26] : memref<9x64x64xf32, #tpu.memory_space<vmem>>, vector<1x64x64xf32>
    %27 = vector.shape_cast %26 : vector<1x64x64xf32> to vector<64x64xf32>
    %cst_27 = arith.constant dense<0.000000e+00> : vector<8x64xf32>
    %28 = tpu.matmul %23, %27, %cst_27 {dimension_numbers = #tpu.dot_dimension_numbers<[1], [0], [0], [1], [0, 0, 1, 1], [], []>} : vector<8x64xf32>, vector<64x64xf32>, vector<8x64xf32> -> vector<8x64xf32>
    %cst_28 = arith.constant dense<0.000000e+00> : vector<16x64xf32>
    %29 = tpu.matmul %25, %28, %cst_28 {dimension_numbers = #tpu.dot_dimension_numbers<[1], [0], [0], [1], [0, 0, 1, 1], [], []>} : vector<16x8xf32>, vector<8x64xf32>, vector<16x64xf32> -> vector<16x64xf32>
    %c1_29 = arith.constant 1 : index
    %c0_30 = arith.constant 0 : index
    %c0_31 = arith.constant 0 : index
    %30 = vector.load %arg6[%c1_29, %c0_30, %c0_31] : memref<9x64x64xf32, #tpu.memory_space<vmem>>, vector<1x64x64xf32>
    %31 = vector.shape_cast %30 : vector<1x64x64xf32> to vector<64x64xf32>
    %cst_32 = arith.constant dense<0.000000e+00> : vector<8x64xf32>
    %32 = tpu.matmul %23, %31, %cst_32 {dimension_numbers = #tpu.dot_dimension_numbers<[1], [0], [0], [1], [0, 0, 1, 1], [], []>} : vector<8x64xf32>, vector<64x64xf32>, vector<8x64xf32> -> vector<8x64xf32>
    %c1_33 = arith.constant 1 : index
    %c0_34 = arith.constant 0 : index
    %c0_35 = arith.constant 0 : index
    %33 = vector.load %arg4[%c1_33, %c0_34, %c0_35] : memref<9x16x8xf32, #tpu.memory_space<vmem>>, vector<1x16x8xf32>
    %34 = vector.shape_cast %33 : vector<1x16x8xf32> to vector<16x8xf32>
    %cst_36 = arith.constant dense<0.000000e+00> : vector<16x64xf32>
    %35 = tpu.matmul %34, %32, %cst_36 {dimension_numbers = #tpu.dot_dimension_numbers<[1], [0], [0], [1], [0, 0, 1, 1], [], []>} : vector<16x8xf32>, vector<8x64xf32>, vector<16x64xf32> -> vector<16x64xf32>
    %36 = arith.addf %29, %35 : vector<16x64xf32>
    %c2_37 = arith.constant 2 : index
    %c0_38 = arith.constant 0 : index
    %c0_39 = arith.constant 0 : index
    %37 = vector.load %arg6[%c2_37, %c0_38, %c0_39] : memref<9x64x64xf32, #tpu.memory_space<vmem>>, vector<1x64x64xf32>
    %38 = vector.shape_cast %37 : vector<1x64x64xf32> to vector<64x64xf32>
    %cst_40 = arith.constant dense<0.000000e+00> : vector<8x64xf32>
    %39 = tpu.matmul %23, %38, %cst_40 {dimension_numbers = #tpu.dot_dimension_numbers<[1], [0], [0], [1], [0, 0, 1, 1], [], []>} : vector<8x64xf32>, vector<64x64xf32>, vector<8x64xf32> -> vector<8x64xf32>
    %c2_41 = arith.constant 2 : index
    %c0_42 = arith.constant 0 : index
    %c0_43 = arith.constant 0 : index
    %40 = vector.load %arg4[%c2_41, %c0_42, %c0_43] : memref<9x16x8xf32, #tpu.memory_space<vmem>>, vector<1x16x8xf32>
    %41 = vector.shape_cast %40 : vector<1x16x8xf32> to vector<16x8xf32>
    %cst_44 = arith.constant dense<0.000000e+00> : vector<16x64xf32>
    %42 = tpu.matmul %41, %39, %cst_44 {dimension_numbers = #tpu.dot_dimension_numbers<[1], [0], [0], [1], [0, 0, 1, 1], [], []>} : vector<16x8xf32>, vector<8x64xf32>, vector<16x64xf32> -> vector<16x64xf32>
    %43 = arith.addf %36, %42 : vector<16x64xf32>
    %c3_45 = arith.constant 3 : index
    %c0_46 = arith.constant 0 : index
    %c0_47 = arith.constant 0 : index
    %44 = vector.load %arg6[%c3_45, %c0_46, %c0_47] : memref<9x64x64xf32, #tpu.memory_space<vmem>>, vector<1x64x64xf32>
    %45 = vector.shape_cast %44 : vector<1x64x64xf32> to vector<64x64xf32>
    %cst_48 = arith.constant dense<0.000000e+00> : vector<8x64xf32>
    %46 = tpu.matmul %23, %45, %cst_48 {dimension_numbers = #tpu.dot_dimension_numbers<[1], [0], [0], [1], [0, 0, 1, 1], [], []>} : vector<8x64xf32>, vector<64x64xf32>, vector<8x64xf32> -> vector<8x64xf32>
    %c3_49 = arith.constant 3 : index
    %c0_50 = arith.constant 0 : index
    %c0_51 = arith.constant 0 : index
    %47 = vector.load %arg4[%c3_49, %c0_50, %c0_51] : memref<9x16x8xf32, #tpu.memory_space<vmem>>, vector<1x16x8xf32>
    %48 = vector.shape_cast %47 : vector<1x16x8xf32> to vector<16x8xf32>
    %cst_52 = arith.constant dense<0.000000e+00> : vector<16x64xf32>
    %49 = tpu.matmul %48, %46, %cst_52 {dimension_numbers = #tpu.dot_dimension_numbers<[1], [0], [0], [1], [0, 0, 1, 1], [], []>} : vector<16x8xf32>, vector<8x64xf32>, vector<16x64xf32> -> vector<16x64xf32>
    %50 = arith.addf %43, %49 : vector<16x64xf32>
    %c4 = arith.constant 4 : index
    %c0_53 = arith.constant 0 : index
    %c0_54 = arith.constant 0 : index
    %51 = vector.load %arg6[%c4, %c0_53, %c0_54] : memref<9x64x64xf32, #tpu.memory_space<vmem>>, vector<1x64x64xf32>
    %52 = vector.shape_cast %51 : vector<1x64x64xf32> to vector<64x64xf32>
    %cst_55 = arith.constant dense<0.000000e+00> : vector<8x64xf32>
    %53 = tpu.matmul %23, %52, %cst_55 {dimension_numbers = #tpu.dot_dimension_numbers<[1], [0], [0], [1], [0, 0, 1, 1], [], []>} : vector<8x64xf32>, vector<64x64xf32>, vector<8x64xf32> -> vector<8x64xf32>
    %c4_56 = arith.constant 4 : index
    %c0_57 = arith.constant 0 : index
    %c0_58 = arith.constant 0 : index
    %54 = vector.load %arg4[%c4_56, %c0_57, %c0_58] : memref<9x16x8xf32, #tpu.memory_space<vmem>>, vector<1x16x8xf32>
    %55 = vector.shape_cast %54 : vector<1x16x8xf32> to vector<16x8xf32>
    %cst_59 = arith.constant dense<0.000000e+00> : vector<16x64xf32>
    %56 = tpu.matmul %55, %53, %cst_59 {dimension_numbers = #tpu.dot_dimension_numbers<[1], [0], [0], [1], [0, 0, 1, 1], [], []>} : vector<16x8xf32>, vector<8x64xf32>, vector<16x64xf32> -> vector<16x64xf32>
    %57 = arith.addf %50, %56 : vector<16x64xf32>
    %c5 = arith.constant 5 : index
    %c0_60 = arith.constant 0 : index
    %c0_61 = arith.constant 0 : index
    %58 = vector.load %arg6[%c5, %c0_60, %c0_61] : memref<9x64x64xf32, #tpu.memory_space<vmem>>, vector<1x64x64xf32>
    %59 = vector.shape_cast %58 : vector<1x64x64xf32> to vector<64x64xf32>
    %cst_62 = arith.constant dense<0.000000e+00> : vector<8x64xf32>
    %60 = tpu.matmul %23, %59, %cst_62 {dimension_numbers = #tpu.dot_dimension_numbers<[1], [0], [0], [1], [0, 0, 1, 1], [], []>} : vector<8x64xf32>, vector<64x64xf32>, vector<8x64xf32> -> vector<8x64xf32>
    %c5_63 = arith.constant 5 : index
    %c0_64 = arith.constant 0 : index
    %c0_65 = arith.constant 0 : index
    %61 = vector.load %arg4[%c5_63, %c0_64, %c0_65] : memref<9x16x8xf32, #tpu.memory_space<vmem>>, vector<1x16x8xf32>
    %62 = vector.shape_cast %61 : vector<1x16x8xf32> to vector<16x8xf32>
    %cst_66 = arith.constant dense<0.000000e+00> : vector<16x64xf32>
    %63 = tpu.matmul %62, %60, %cst_66 {dimension_numbers = #tpu.dot_dimension_numbers<[1], [0], [0], [1], [0, 0, 1, 1], [], []>} : vector<16x8xf32>, vector<8x64xf32>, vector<16x64xf32> -> vector<16x64xf32>
    %64 = arith.addf %57, %63 : vector<16x64xf32>
    %c6 = arith.constant 6 : index
    %c0_67 = arith.constant 0 : index
    %c0_68 = arith.constant 0 : index
    %65 = vector.load %arg6[%c6, %c0_67, %c0_68] : memref<9x64x64xf32, #tpu.memory_space<vmem>>, vector<1x64x64xf32>
    %66 = vector.shape_cast %65 : vector<1x64x64xf32> to vector<64x64xf32>
    %cst_69 = arith.constant dense<0.000000e+00> : vector<8x64xf32>
    %67 = tpu.matmul %23, %66, %cst_69 {dimension_numbers = #tpu.dot_dimension_numbers<[1], [0], [0], [1], [0, 0, 1, 1], [], []>} : vector<8x64xf32>, vector<64x64xf32>, vector<8x64xf32> -> vector<8x64xf32>
    %c6_70 = arith.constant 6 : index
    %c0_71 = arith.constant 0 : index
    %c0_72 = arith.constant 0 : index
    %68 = vector.load %arg4[%c6_70, %c0_71, %c0_72] : memref<9x16x8xf32, #tpu.memory_space<vmem>>, vector<1x16x8xf32>
    %69 = vector.shape_cast %68 : vector<1x16x8xf32> to vector<16x8xf32>
    %cst_73 = arith.constant dense<0.000000e+00> : vector<16x64xf32>
    %70 = tpu.matmul %69, %67, %cst_73 {dimension_numbers = #tpu.dot_dimension_numbers<[1], [0], [0], [1], [0, 0, 1, 1], [], []>} : vector<16x8xf32>, vector<8x64xf32>, vector<16x64xf32> -> vector<16x64xf32>
    %71 = arith.addf %64, %70 : vector<16x64xf32>
    %c7 = arith.constant 7 : index
    %c0_74 = arith.constant 0 : index
    %c0_75 = arith.constant 0 : index
    %72 = vector.load %arg6[%c7, %c0_74, %c0_75] : memref<9x64x64xf32, #tpu.memory_space<vmem>>, vector<1x64x64xf32>
    %73 = vector.shape_cast %72 : vector<1x64x64xf32> to vector<64x64xf32>
    %cst_76 = arith.constant dense<0.000000e+00> : vector<8x64xf32>
    %74 = tpu.matmul %23, %73, %cst_76 {dimension_numbers = #tpu.dot_dimension_numbers<[1], [0], [0], [1], [0, 0, 1, 1], [], []>} : vector<8x64xf32>, vector<64x64xf32>, vector<8x64xf32> -> vector<8x64xf32>
    %c7_77 = arith.constant 7 : index
    %c0_78 = arith.constant 0 : index
    %c0_79 = arith.constant 0 : index
    %75 = vector.load %arg4[%c7_77, %c0_78, %c0_79] : memref<9x16x8xf32, #tpu.memory_space<vmem>>, vector<1x16x8xf32>
    %76 = vector.shape_cast %75 : vector<1x16x8xf32> to vector<16x8xf32>
    %cst_80 = arith.constant dense<0.000000e+00> : vector<16x64xf32>
    %77 = tpu.matmul %76, %74, %cst_80 {dimension_numbers = #tpu.dot_dimension_numbers<[1], [0], [0], [1], [0, 0, 1, 1], [], []>} : vector<16x8xf32>, vector<8x64xf32>, vector<16x64xf32> -> vector<16x64xf32>
    %78 = arith.addf %71, %77 : vector<16x64xf32>
    %c8 = arith.constant 8 : index
    %c0_81 = arith.constant 0 : index
    %c0_82 = arith.constant 0 : index
    %79 = vector.load %arg6[%c8, %c0_81, %c0_82] : memref<9x64x64xf32, #tpu.memory_space<vmem>>, vector<1x64x64xf32>
    %80 = vector.shape_cast %79 : vector<1x64x64xf32> to vector<64x64xf32>
    %cst_83 = arith.constant dense<0.000000e+00> : vector<8x64xf32>
    %81 = tpu.matmul %23, %80, %cst_83 {dimension_numbers = #tpu.dot_dimension_numbers<[1], [0], [0], [1], [0, 0, 1, 1], [], []>} : vector<8x64xf32>, vector<64x64xf32>, vector<8x64xf32> -> vector<8x64xf32>
    %c8_84 = arith.constant 8 : index
    %c0_85 = arith.constant 0 : index
    %c0_86 = arith.constant 0 : index
    %82 = vector.load %arg4[%c8_84, %c0_85, %c0_86] : memref<9x16x8xf32, #tpu.memory_space<vmem>>, vector<1x16x8xf32>
    %83 = vector.shape_cast %82 : vector<1x16x8xf32> to vector<16x8xf32>
    %cst_87 = arith.constant dense<0.000000e+00> : vector<16x64xf32>
    %84 = tpu.matmul %83, %81, %cst_87 {dimension_numbers = #tpu.dot_dimension_numbers<[1], [0], [0], [1], [0, 0, 1, 1], [], []>} : vector<16x8xf32>, vector<8x64xf32>, vector<16x64xf32> -> vector<16x64xf32>
    %85 = arith.addf %78, %84 : vector<16x64xf32>
    %c0_88 = arith.constant 0 : index
    %c0_89 = arith.constant 0 : index
    %86 = vector.load %arg5[%c0_88, %c0_89] : memref<16x1xf32, #tpu.memory_space<vmem>>, vector<16x1xf32>
    %87 = vector.broadcast %86 : vector<16x1xf32> to vector<16x64xf32>
    %88 = arith.addf %85, %87 : vector<16x64xf32>
    %cst_90 = arith.constant 0.000000e+00 : f32
    %89 = vector.broadcast %cst_90 : f32 to vector<16x64xf32>
    %90 = arith.maximumf %88, %89 : vector<16x64xf32>
    %c0_91 = arith.constant 0 : index
    %c0_92 = arith.constant 0 : index
    %c0_93 = arith.constant 0 : index
    %91 = vector.load %arg7[%c0_91, %c0_92, %c0_93] : memref<4x64x16xf32, #tpu.memory_space<vmem>>, vector<1x64x16xf32>
    %92 = vector.shape_cast %91 : vector<1x64x16xf32> to vector<64x16xf32>
    %cst_94 = arith.constant dense<0.000000e+00> : vector<16x16xf32>
    %93 = tpu.matmul %90, %92, %cst_94 {dimension_numbers = #tpu.dot_dimension_numbers<[1], [0], [0], [1], [0, 0, 1, 1], [], []>} : vector<16x64xf32>, vector<64x16xf32>, vector<16x16xf32> -> vector<16x16xf32>
    %c1_95 = arith.constant 1 : index
    %c0_96 = arith.constant 0 : index
    %c0_97 = arith.constant 0 : index
    %94 = vector.load %arg7[%c1_95, %c0_96, %c0_97] : memref<4x64x16xf32, #tpu.memory_space<vmem>>, vector<1x64x16xf32>
    %95 = vector.shape_cast %94 : vector<1x64x16xf32> to vector<64x16xf32>
    %cst_98 = arith.constant dense<0.000000e+00> : vector<16x16xf32>
    %96 = tpu.matmul %90, %95, %cst_98 {dimension_numbers = #tpu.dot_dimension_numbers<[1], [0], [0], [1], [0, 0, 1, 1], [], []>} : vector<16x64xf32>, vector<64x16xf32>, vector<16x16xf32> -> vector<16x16xf32>
    %97 = arith.maximumf %93, %96 : vector<16x16xf32>
    %c2_99 = arith.constant 2 : index
    %c0_100 = arith.constant 0 : index
    %c0_101 = arith.constant 0 : index
    %98 = vector.load %arg7[%c2_99, %c0_100, %c0_101] : memref<4x64x16xf32, #tpu.memory_space<vmem>>, vector<1x64x16xf32>
    %99 = vector.shape_cast %98 : vector<1x64x16xf32> to vector<64x16xf32>
    %cst_102 = arith.constant dense<0.000000e+00> : vector<16x16xf32>
    %100 = tpu.matmul %90, %99, %cst_102 {dimension_numbers = #tpu.dot_dimension_numbers<[1], [0], [0], [1], [0, 0, 1, 1], [], []>} : vector<16x64xf32>, vector<64x16xf32>, vector<16x16xf32> -> vector<16x16xf32>
    %101 = arith.maximumf %97, %100 : vector<16x16xf32>
    %c3_103 = arith.constant 3 : index
    %c0_104 = arith.constant 0 : index
    %c0_105 = arith.constant 0 : index
    %102 = vector.load %arg7[%c3_103, %c0_104, %c0_105] : memref<4x64x16xf32, #tpu.memory_space<vmem>>, vector<1x64x16xf32>
    %103 = vector.shape_cast %102 : vector<1x64x16xf32> to vector<64x16xf32>
    %cst_106 = arith.constant dense<0.000000e+00> : vector<16x16xf32>
    %104 = tpu.matmul %90, %103, %cst_106 {dimension_numbers = #tpu.dot_dimension_numbers<[1], [0], [0], [1], [0, 0, 1, 1], [], []>} : vector<16x64xf32>, vector<64x16xf32>, vector<16x16xf32> -> vector<16x16xf32>
    %105 = arith.maximumf %101, %104 : vector<16x16xf32>
    %c0_107 = arith.constant 0 : index
    %c0_108 = arith.constant 0 : index
    %106 = vector.load %arg11[%c0_107, %c0_108] : memref<16x16xf32, #tpu.memory_space<vmem>>, vector<16x16xf32>
    tpu.vector_store %arg11[%c0_107, %c0_108], %105 {strides = array<i32>} : memref<16x16xf32, #tpu.memory_space<vmem>>, vector<16x16xf32>,
    %c0_109 = arith.constant 0 : index
    %c0_110 = arith.constant 0 : index
    %c0_111 = arith.constant 0 : index
    %107 = vector.load %arg8[%c0_109, %c0_110, %c0_111] : memref<32x16x16xf32, #tpu.memory_space<vmem>>, vector<32x16x16xf32>
    %108 = vector.shape_cast %105 : vector<16x16xf32> to vector<1x16x16xf32>
    %109 = vector.broadcast %108 : vector<1x16x16xf32> to vector<32x16x16xf32>
    %110 = arith.mulf %107, %109 : vector<32x16x16xf32>
    %c0_112 = arith.constant 0 : index
    %c0_113 = arith.constant 0 : index
    %111 = vector.load %arg9[%c0_112, %c0_113] : memref<32x1xf32, #tpu.memory_space<vmem>>, vector<32x1xf32>
    %cst_114 = arith.constant dense<0.000000e+00> : vector<32x16xf32>
    %112 = vector.multi_reduction <add>, %110, %cst_114 [2] : vector<32x16x16xf32> to vector<32x16xf32>
    %cst_115 = arith.constant dense<0.000000e+00> : vector<32xf32>
    %113 = vector.multi_reduction <add>, %112, %cst_115 [1] : vector<32x16xf32> to vector<32xf32>
    %114 = vector.shape_cast %113 : vector<32xf32> to vector<32x1xf32>
    %115 = arith.addf %111, %114 : vector<32x1xf32>
    %c0_116 = arith.constant 0 : index
    %c0_117 = arith.constant 0 : index
    %116 = vector.load %arg12[%c0_116, %c0_117] : memref<32x1xf32, #tpu.memory_space<vmem>>, vector<32x1xf32>
    tpu.vector_store %arg12[%c0_116, %c0_117], %115 {strides = array<i32>} : memref<32x1xf32, #tpu.memory_space<vmem>>, vector<32x1xf32>,
    return
  }
}

</mosaic_0001>

<llo_original>
// kernel: feature_extractor_forward.1
$region0: #{feature_extractor_forward.1}
  #allocation0 [shape = 'u32[]', space=smem, size = 0x4, offset = 0x4, fixed_abs, tag = 'smem constant byte address 0x4 - core index']
  #allocation1 [shape = 'u32[72,128]{1,0:T(1,128)}', space=vmem, size = 0x9000, scoped, tag = 'internal scratch']
  %s0 = inlined_call_operand.vmem [shape: f32[36,256], index: 0, kind: input, shape index: {}]
  %s1 = inlined_call_operand.vmem [shape: f32[8,36], index: 1, kind: input, shape index: {}]
  %s2 = inlined_call_operand.vmem [shape: f32[8,1], index: 2, kind: input, shape index: {}]
  %s3 = inlined_call_operand.vmem [shape: f32[4,256,64], index: 3, kind: input, shape index: {}]
  %s4 = inlined_call_operand.vmem [shape: f32[9,16,8], index: 4, kind: input, shape index: {}]
  %s5 = inlined_call_operand.vmem [shape: f32[16,1], index: 5, kind: input, shape index: {}]
  %s6 = inlined_call_operand.vmem [shape: f32[9,64,64], index: 6, kind: input, shape index: {}]
  %s7 = inlined_call_operand.vmem [shape: f32[4,64,16], index: 7, kind: input, shape index: {}]
  %s8 = inlined_call_operand.vmem [shape: f32[32,16,16], index: 8, kind: input, shape index: {}]
  %s9 = inlined_call_operand.vmem [shape: f32[32,1], index: 9, kind: input, shape index: {}]
  %s10 = inlined_call_operand.vmem [shape: f32[8,256], index: 10, kind: output, shape index: {0}]
  %s11 = inlined_call_operand.vmem [shape: f32[16,16], index: 11, kind: output, shape index: {1}]
  %s12 = inlined_call_operand.vmem [shape: f32[32,1], index: 12, kind: output, shape index: {2}]
  %13 = xla_tuple %s10, %s11, %s12
  %s14 = sld [smem:[#allocation0]]
  $region66: #{feature_extractor_forward.1} parent=0
    _
  %s16 = ssub.s32 1, %s14
  %s17 = scalar_select 0, %s16, %s14
  // Predicated region
  $region2: #{feature_extractor_forward.1} parent=0 // pred_check
    _
  $region3: #{feature_extractor_forward.1} parent=0 // pred_check_branch
    %19 = sbr.rel (0) target = $region5
  $region4: #{feature_extractor_forward.1} parent=0 // pred_region
    _
  $region5: #{feature_extractor_forward.1} parent=0 // pred_fallthru
    _
  // Predicated region
  $region6: #{feature_extractor_forward.1} parent=0 // pred_check
    _
  $region7: #{feature_extractor_forward.1} parent=0 // pred_check_branch
    %21 = sbr.rel (0) target = $region9
  $region8: #{feature_extractor_forward.1} parent=0 // pred_region
    _
  $region9: #{feature_extractor_forward.1} parent=0 // pred_fallthru
    _
  // Predicated region
  $region10: #{feature_extractor_forward.1} parent=0 // pred_check
    _
  $region11: #{feature_extractor_forward.1} parent=0 // pred_check_branch
    %23 = sbr.rel (0) target = $region13
  $region12: #{feature_extractor_forward.1} parent=0 // pred_region
    _
  $region13: #{feature_extractor_forward.1} parent=0 // pred_fallthru
    _
  // Predicated region
  $region14: #{feature_extractor_forward.1} parent=0 // pred_check
    _
  $region15: #{feature_extractor_forward.1} parent=0 // pred_check_branch
    %25 = sbr.rel (0) target = $region17
  $region16: #{feature_extractor_forward.1} parent=0 // pred_region
    _
  $region17: #{feature_extractor_forward.1} parent=0 // pred_fallthru
    _
  // Predicated region
  $region18: #{feature_extractor_forward.1} parent=0 // pred_check
    _
  $region19: #{feature_extractor_forward.1} parent=0 // pred_check_branch
    %27 = sbr.rel (0) target = $region21
  $region20: #{feature_extractor_forward.1} parent=0 // pred_region
    _
  $region21: #{feature_extractor_forward.1} parent=0 // pred_fallthru
    _
  // Predicated region
  $region22: #{feature_extractor_forward.1} parent=0 // pred_check
    _
  $region23: #{feature_extractor_forward.1} parent=0 // pred_check_branch
    %29 = sbr.rel (0) target = $region25
  $region24: #{feature_extractor_forward.1} parent=0 // pred_region
    _
  $region25: #{feature_extractor_forward.1} parent=0 // pred_fallthru
    _
  // Predicated region
  $region26: #{feature_extractor_forward.1} parent=0 // pred_check
    _
  $region27: #{feature_extractor_forward.1} parent=0 // pred_check_branch
    %31 = sbr.rel (0) target = $region29
  $region28: #{feature_extractor_forward.1} parent=0 // pred_region
    _
  $region29: #{feature_extractor_forward.1} parent=0 // pred_fallthru
    _
  // Predicated region
  $region30: #{feature_extractor_forward.1} parent=0 // pred_check
    _
  $region31: #{feature_extractor_forward.1} parent=0 // pred_check_branch
    %33 = sbr.rel (0) target = $region33
  $region32: #{feature_extractor_forward.1} parent=0 // pred_region
    _
  $region33: #{feature_extractor_forward.1} parent=0 // pred_fallthru
    _
  // Predicated region
  $region34: #{feature_extractor_forward.1} parent=0 // pred_check
    _
  $region35: #{feature_extractor_forward.1} parent=0 // pred_check_branch
    %35 = sbr.rel (0) target = $region37
  $region36: #{feature_extractor_forward.1} parent=0 // pred_region
    _
  $region37: #{feature_extractor_forward.1} parent=0 // pred_fallthru
    _
  // Predicated region
  $region38: #{feature_extractor_forward.1} parent=0 // pred_check
    _
  $region39: #{feature_extractor_forward.1} parent=0 // pred_check_branch
    %37 = sbr.rel (0) target = $region41
  $region40: #{feature_extractor_forward.1} parent=0 // pred_region
    _
  $region41: #{feature_extractor_forward.1} parent=0 // pred_fallthru
    _
  %v38 = vld [vmem:[%s1] sm:$0xff]
  %v39 = vld [vmem:[%s0] sm:$0xff]
  %v40 = vld [vmem:[%s0 + $0x8] sm:$0xff]
  %v41 = vld [vmem:[%s0 + $0x10] sm:$0xff]
  %v42 = vld [vmem:[%s0 + $0x18] sm:$0xff]
  %v43 = vld [vmem:[%s0 + $0x20] sm:$0xff]
  %v44 = vld [vmem:[%s0 + $0x28] sm:$0xff]
  %v45 = vld [vmem:[%s0 + $0x30] sm:$0xff]
  %v46 = vld [vmem:[%s0 + $0x38] sm:$0xff]
  %v47 = vld [vmem:[%s0 + $0x40] sm:$0xf]
  %v48 = vld [vmem:[%s0 + $0x48] sm:$0xf]
  %v49 = vld [vmem:[%s2] sm:$0xff]
  %51 = vset.pattern.permute.xlu0 0
  %52 = vperm.xlu0 %51, %v49
  %v53 = vpop.permute.xlu0 %52
  %vm55 = vcmask 293888
  %v57 = vsel %vm55, %v38, 0
  %vm59 = vcmask 1043456
  %v61 = vsel %vm59, %v47, 0
  %v64 = vsel %vm59, %v48, 0
  %66 = vmatpush.msra.mxu0 0.0
  %67 = vmatpush.msra.mxu0 0.0
  %68 = vmatpush.msra.mxu0 0.0
  %69 = vmatpush.msra.mxu0 0.0
  %70 = vmatpush.msra.mxu0 0.0
  %71 = vmatpush.msra.mxu0 0.0
  %72 = vmatpush.msra.mxu0 0.0
  %73 = vmatpush.msra.mxu0 0.0
  %74 = vmatpush.msra.mxu0 0.0
  %75 = vmatpush.msra.mxu0 0.0
  %76 = vmatpush.msra.mxu0 0.0
  %77 = vmatpush.msra.mxu0 %v61
  %78 = vmatpush.msra.mxu0 %v45
  %79 = vmatpush.msra.mxu0 %v43
  %80 = vmatpush.msra.mxu0 %v41
  %81 = vmatpush.msra.mxu0 %v39
  %82 = vmatmul.f32.gmra.mxu0 %v57
  %v83 = vpop.f32.mrf.mxu0
  %v84 = vadd.f32 %v53, %v83
  %85 = vdwg.mxu0
  %86 = vmatpush.msra.mxu0 0.0
  %87 = vmatpush.msra.mxu0 0.0
  %88 = vmatpush.msra.mxu0 0.0
  %89 = vmatpush.msra.mxu0 0.0
  %90 = vmatpush.msra.mxu0 0.0
  %91 = vmatpush.msra.mxu0 0.0
  %92 = vmatpush.msra.mxu0 0.0
  %93 = vmatpush.msra.mxu0 0.0
  %94 = vmatpush.msra.mxu0 0.0
  %95 = vmatpush.msra.mxu0 0.0
  %96 = vmatpush.msra.mxu0 0.0
  %97 = vmatpush.msra.mxu0 %v64
  %98 = vmatpush.msra.mxu0 %v46
  %99 = vmatpush.msra.mxu0 %v44
  %100 = vmatpush.msra.mxu0 %v42
  %101 = vmatpush.msra.mxu0 %v40
  %102 = vmatmul.f32.gmra.mxu0 %v57
  %v103 = vpop.f32.mrf.mxu0
  %v104 = vadd.f32 %v53, %v103
  %105 = vdwg.mxu0
  %v106 = vmax.f32 %v84, 0.0
  %v107 = vmax.f32 %v104, 0.0
  %108 = vst [vmem:[%s10] sm:$0xff] %v106
  %109 = vst [vmem:[%s10 + $0x8] sm:$0xff] %v107
  %v110 = vld [vmem:[%s3] sm:$0xff]
  %v111 = vld [vmem:[%s3 + $0x8] sm:$0xff]
  %v112 = vld [vmem:[%s3 + $0x10] sm:$0xff]
  %v113 = vld [vmem:[%s3 + $0x18] sm:$0xff]
  %v114 = vld [vmem:[%s3 + $0x20] sm:$0xff]
  %v115 = vld [vmem:[%s3 + $0x28] sm:$0xff]
  %v116 = vld [vmem:[%s3 + $0x30] sm:$0xff]
  %v117 = vld [vmem:[%s3 + $0x38] sm:$0xff]
  %v118 = vld [vmem:[%s3 + $0x40] sm:$0xff]
  %v119 = vld [vmem:[%s3 + $0x48] sm:$0xff]
  %v120 = vld [vmem:[%s3 + $0x50] sm:$0xff]
  %v121 = vld [vmem:[%s3 + $0x58] sm:$0xff]
  %v122 = vld [vmem:[%s3 + $0x60] sm:$0xff]
  %v123 = vld [vmem:[%s3 + $0x68] sm:$0xff]
  %v124 = vld [vmem:[%s3 + $0x70] sm:$0xff]
  %v125 = vld [vmem:[%s3 + $0x78] sm:$0xff]
  %v126 = vld [vmem:[%s3 + $0x80] sm:$0xff]
  %v127 = vld [vmem:[%s3 + $0x88] sm:$0xff]
  %v128 = vld [vmem:[%s3 + $0x90] sm:$0xff]
  %v129 = vld [vmem:[%s3 + $0x98] sm:$0xff]
  %v130 = vld [vmem:[%s3 + $0xa0] sm:$0xff]
  %v131 = vld [vmem:[%s3 + $0xa8] sm:$0xff]
  %v132 = vld [vmem:[%s3 + $0xb0] sm:$0xff]
  %v133 = vld [vmem:[%s3 + $0xb8] sm:$0xff]
  %v134 = vld [vmem:[%s3 + $0xc0] sm:$0xff]
  %v135 = vld [vmem:[%s3 + $0xc8] sm:$0xff]
  %v136 = vld [vmem:[%s3 + $0xd0] sm:$0xff]
  %v137 = vld [vmem:[%s3 + $0xd8] sm:$0xff]
  %v138 = vld [vmem:[%s3 + $0xe0] sm:$0xff]
  %v139 = vld [vmem:[%s3 + $0xe8] sm:$0xff]
  %v140 = vld [vmem:[%s3 + $0xf0] sm:$0xff]
  %v141 = vld [vmem:[%s3 + $0xf8] sm:$0xff]
  %142 = vmatpush.msra.mxu0 %v125
  %143 = vmatpush.msra.mxu0 %v124
  %144 = vmatpush.msra.mxu0 %v123
  %145 = vmatpush.msra.mxu0 %v122
  %146 = vmatpush.msra.mxu0 %v121
  %147 = vmatpush.msra.mxu0 %v120
  %148 = vmatpush.msra.mxu0 %v119
  %149 = vmatpush.msra.mxu0 %v118
  %150 = vmatpush.msra.mxu0 %v117
  %151 = vmatpush.msra.mxu0 %v116
  %152 = vmatpush.msra.mxu0 %v115
  %153 = vmatpush.msra.mxu0 %v114
  %154 = vmatpush.msra.mxu0 %v113
  %155 = vmatpush.msra.mxu0 %v112
  %156 = vmatpush.msra.mxu0 %v111
  %157 = vmatpush.msra.mxu0 %v110
  %158 = vmatmul.f32.gmra.mxu0 %v106
  %v159 = vpop.f32.mrf.mxu0
  %v160 = vadd.f32 0.0, %v159
  %161 = vdwg.mxu0
  %162 = vmatpush.msra.mxu0 %v141
  %163 = vmatpush.msra.mxu0 %v140
  %164 = vmatpush.msra.mxu0 %v139
  %165 = vmatpush.msra.mxu0 %v138
  %166 = vmatpush.msra.mxu0 %v137
  %167 = vmatpush.msra.mxu0 %v136
  %168 = vmatpush.msra.mxu0 %v135
  %169 = vmatpush.msra.mxu0 %v134
  %170 = vmatpush.msra.mxu0 %v133
  %171 = vmatpush.msra.mxu0 %v132
  %172 = vmatpush.msra.mxu0 %v131
  %173 = vmatpush.msra.mxu0 %v130
  %174 = vmatpush.msra.mxu0 %v129
  %175 = vmatpush.msra.mxu0 %v128
  %176 = vmatpush.msra.mxu0 %v127
  %177 = vmatpush.msra.mxu0 %v126
  %178 = vmatmul.f32.gmra.mxu0 %v107
  %v179 = vpop.f32.mrf.mxu0
  %v180 = vadd.f32 %v160, %v179
  %181 = vdwg.mxu0
  %s182 = scalar_lea.vmem %s3, 256
  %v183 = vld [vmem:[%s182] sm:$0xff]
  %v184 = vld [vmem:[%s182 + $0x8] sm:$0xff]
  %v185 = vld [vmem:[%s182 + $0x10] sm:$0xff]
  %v186 = vld [vmem:[%s182 + $0x18] sm:$0xff]
  %v187 = vld [vmem:[%s182 + $0x20] sm:$0xff]
  %v188 = vld [vmem:[%s182 + $0x28] sm:$0xff]
  %v189 = vld [vmem:[%s182 + $0x30] sm:$0xff]
  %v190 = vld [vmem:[%s182 + $0x38] sm:$0xff]
  %v191 = vld [vmem:[%s182 + $0x40] sm:$0xff]
  %v192 = vld [vmem:[%s182 + $0x48] sm:$0xff]
  %v193 = vld [vmem:[%s182 + $0x50] sm:$0xff]
  %v194 = vld [vmem:[%s182 + $0x58] sm:$0xff]
  %v195 = vld [vmem:[%s182 + $0x60] sm:$0xff]
  %v196 = vld [vmem:[%s182 + $0x68] sm:$0xff]
  %v197 = vld [vmem:[%s182 + $0x70] sm:$0xff]
  %v198 = vld [vmem:[%s182 + $0x78] sm:$0xff]
  %v199 = vld [vmem:[%s182 + $0x80] sm:$0xff]
  %v200 = vld [vmem:[%s182 + $0x88] sm:$0xff]
  %v201 = vld [vmem:[%s182 + $0x90] sm:$0xff]
  %v202 = vld [vmem:[%s182 + $0x98] sm:$0xff]
  %v203 = vld [vmem:[%s182 + $0xa0] sm:$0xff]
  %v204 = vld [vmem:[%s182 + $0xa8] sm:$0xff]
  %v205 = vld [vmem:[%s182 + $0xb0] sm:$0xff]
  %v206 = vld [vmem:[%s182 + $0xb8] sm:$0xff]
  %v207 = vld [vmem:[%s182 + $0xc0] sm:$0xff]
  %v208 = vld [vmem:[%s182 + $0xc8] sm:$0xff]
  %v209 = vld [vmem:[%s182 + $0xd0] sm:$0xff]
  %v210 = vld [vmem:[%s182 + $0xd8] sm:$0xff]
  %v211 = vld [vmem:[%s182 + $0xe0] sm:$0xff]
  %v212 = vld [vmem:[%s182 + $0xe8] sm:$0xff]
  %v213 = vld [vmem:[%s182 + $0xf0] sm:$0xff]
  %v214 = vld [vmem:[%s182 + $0xf8] sm:$0xff]
  %215 = vmatpush.msra.mxu0 %v198
  %216 = vmatpush.msra.mxu0 %v197
  %217 = vmatpush.msra.mxu0 %v196
  %218 = vmatpush.msra.mxu0 %v195
  %219 = vmatpush.msra.mxu0 %v194
  %220 = vmatpush.msra.mxu0 %v193
  %221 = vmatpush.msra.mxu0 %v192
  %222 = vmatpush.msra.mxu0 %v191
  %223 = vmatpush.msra.mxu0 %v190
  %224 = vmatpush.msra.mxu0 %v189
  %225 = vmatpush.msra.mxu0 %v188
  %226 = vmatpush.msra.mxu0 %v187
  %227 = vmatpush.msra.mxu0 %v186
  %228 = vmatpush.msra.mxu0 %v185
  %229 = vmatpush.msra.mxu0 %v184
  %230 = vmatpush.msra.mxu0 %v183
  %231 = vmatmul.f32.gmra.mxu0 %v106
  %v232 = vpop.f32.mrf.mxu0
  %v233 = vadd.f32 0.0, %v232
  %234 = vdwg.mxu0
  %235 = vmatpush.msra.mxu0 %v214
  %236 = vmatpush.msra.mxu0 %v213
  %237 = vmatpush.msra.mxu0 %v212
  %238 = vmatpush.msra.mxu0 %v211
  %239 = vmatpush.msra.mxu0 %v210
  %240 = vmatpush.msra.mxu0 %v209
  %241 = vmatpush.msra.mxu0 %v208
  %242 = vmatpush.msra.mxu0 %v207
  %243 = vmatpush.msra.mxu0 %v206
  %244 = vmatpush.msra.mxu0 %v205
  %245 = vmatpush.msra.mxu0 %v204
  %246 = vmatpush.msra.mxu0 %v203
  %247 = vmatpush.msra.mxu0 %v202
  %248 = vmatpush.msra.mxu0 %v201
  %249 = vmatpush.msra.mxu0 %v200
  %250 = vmatpush.msra.mxu0 %v199
  %251 = vmatmul.f32.gmra.mxu0 %v107
  %v252 = vpop.f32.mrf.mxu0
  %v253 = vadd.f32 %v233, %v252
  %254 = vdwg.mxu0
  %v255 = vmax.f32 %v180, %v253
  %s256 = scalar_lea.vmem %s3, 512
  %v257 = vld [vmem:[%s256] sm:$0xff]
  %v258 = vld [vmem:[%s256 + $0x8] sm:$0xff]
  %v259 = vld [vmem:[%s256 + $0x10] sm:$0xff]
  %v260 = vld [vmem:[%s256 + $0x18] sm:$0xff]
  %v261 = vld [vmem:[%s256 + $0x20] sm:$0xff]
  %v262 = vld [vmem:[%s256 + $0x28] sm:$0xff]
  %v263 = vld [vmem:[%s256 + $0x30] sm:$0xff]
  %v264 = vld [vmem:[%s256 + $0x38] sm:$0xff]
  %v265 = vld [vmem:[%s256 + $0x40] sm:$0xff]
  %v266 = vld [vmem:[%s256 + $0x48] sm:$0xff]
  %v267 = vld [vmem:[%s256 + $0x50] sm:$0xff]
  %v268 = vld [vmem:[%s256 + $0x58] sm:$0xff]
  %v269 = vld [vmem:[%s256 + $0x60] sm:$0xff]
  %v270 = vld [vmem:[%s256 + $0x68] sm:$0xff]
  %v271 = vld [vmem:[%s256 + $0x70] sm:$0xff]
  %v272 = vld [vmem:[%s256 + $0x78] sm:$0xff]
  %v273 = vld [vmem:[%s256 + $0x80] sm:$0xff]
  %v274 = vld [vmem:[%s256 + $0x88] sm:$0xff]
  %v275 = vld [vmem:[%s256 + $0x90] sm:$0xff]
  %v276 = vld [vmem:[%s256 + $0x98] sm:$0xff]
  %v277 = vld [vmem:[%s256 + $0xa0] sm:$0xff]
  %v278 = vld [vmem:[%s256 + $0xa8] sm:$0xff]
  %v279 = vld [vmem:[%s256 + $0xb0] sm:$0xff]
  %v280 = vld [vmem:[%s256 + $0xb8] sm:$0xff]
  %v281 = vld [vmem:[%s256 + $0xc0] sm:$0xff]
  %v282 = vld [vmem:[%s256 + $0xc8] sm:$0xff]
  %v283 = vld [vmem:[%s256 + $0xd0] sm:$0xff]
  %v284 = vld [vmem:[%s256 + $0xd8] sm:$0xff]
  %v285 = vld [vmem:[%s256 + $0xe0] sm:$0xff]
  %v286 = vld [vmem:[%s256 + $0xe8] sm:$0xff]
  %v287 = vld [vmem:[%s256 + $0xf0] sm:$0xff]
  %v288 = vld [vmem:[%s256 + $0xf8] sm:$0xff]
  %289 = vmatpush.msra.mxu0 %v272
  %290 = vmatpush.msra.mxu0 %v271
  %291 = vmatpush.msra.mxu0 %v270
  %292 = vmatpush.msra.mxu0 %v269
  %293 = vmatpush.msra.mxu0 %v268
  %294 = vmatpush.msra.mxu0 %v267
  %295 = vmatpush.msra.mxu0 %v266
  %296 = vmatpush.msra.mxu0 %v265
  %297 = vmatpush.msra.mxu0 %v264
  %298 = vmatpush.msra.mxu0 %v263
  %299 = vmatpush.msra.mxu0 %v262
  %300 = vmatpush.msra.mxu0 %v261
  %301 = vmatpush.msra.mxu0 %v260
  %302 = vmatpush.msra.mxu0 %v259
  %303 = vmatpush.msra.mxu0 %v258
  %304 = vmatpush.msra.mxu0 %v257
  %305 = vmatmul.f32.gmra.mxu0 %v106
  %v306 = vpop.f32.mrf.mxu0
  %v307 = vadd.f32 0.0, %v306
  %308 = vdwg.mxu0
  %309 = vmatpush.msra.mxu0 %v288
  %310 = vmatpush.msra.mxu0 %v287
  %311 = vmatpush.msra.mxu0 %v286
  %312 = vmatpush.msra.mxu0 %v285
  %313 = vmatpush.msra.mxu0 %v284
  %314 = vmatpush.msra.mxu0 %v283
  %315 = vmatpush.msra.mxu0 %v282
  %316 = vmatpush.msra.mxu0 %v281
  %317 = vmatpush.msra.mxu0 %v280
  %318 = vmatpush.msra.mxu0 %v279
  %319 = vmatpush.msra.mxu0 %v278
  %320 = vmatpush.msra.mxu0 %v277
  %321 = vmatpush.msra.mxu0 %v276
  %322 = vmatpush.msra.mxu0 %v275
  %323 = vmatpush.msra.mxu0 %v274
  %324 = vmatpush.msra.mxu0 %v273
  %325 = vmatmul.f32.gmra.mxu0 %v107
  %v326 = vpop.f32.mrf.mxu0
  %v327 = vadd.f32 %v307, %v326
  %328 = vdwg.mxu0
  %v329 = vmax.f32 %v255, %v327
  %s330 = scalar_lea.vmem %s3, 768
  %v331 = vld [vmem:[%s330] sm:$0xff]
  %v332 = vld [vmem:[%s330 + $0x8] sm:$0xff]
  %v333 = vld [vmem:[%s330 + $0x10] sm:$0xff]
  %v334 = vld [vmem:[%s330 + $0x18] sm:$0xff]
  %v335 = vld [vmem:[%s330 + $0x20] sm:$0xff]
  %v336 = vld [vmem:[%s330 + $0x28] sm:$0xff]
  %v337 = vld [vmem:[%s330 + $0x30] sm:$0xff]
  %v338 = vld [vmem:[%s330 + $0x38] sm:$0xff]
  %v339 = vld [vmem:[%s330 + $0x40] sm:$0xff]
  %v340 = vld [vmem:[%s330 + $0x48] sm:$0xff]
  %v341 = vld [vmem:[%s330 + $0x50] sm:$0xff]
  %v342 = vld [vmem:[%s330 + $0x58] sm:$0xff]
  %v343 = vld [vmem:[%s330 + $0x60] sm:$0xff]
  %v344 = vld [vmem:[%s330 + $0x68] sm:$0xff]
  %v345 = vld [vmem:[%s330 + $0x70] sm:$0xff]
  %v346 = vld [vmem:[%s330 + $0x78] sm:$0xff]
  %v347 = vld [vmem:[%s330 + $0x80] sm:$0xff]
  %v348 = vld [vmem:[%s330 + $0x88] sm:$0xff]
  %v349 = vld [vmem:[%s330 + $0x90] sm:$0xff]
  %v350 = vld [vmem:[%s330 + $0x98] sm:$0xff]
  %v351 = vld [vmem:[%s330 + $0xa0] sm:$0xff]
  %v352 = vld [vmem:[%s330 + $0xa8] sm:$0xff]
  %v353 = vld [vmem:[%s330 + $0xb0] sm:$0xff]
  %v354 = vld [vmem:[%s330 + $0xb8] sm:$0xff]
  %v355 = vld [vmem:[%s330 + $0xc0] sm:$0xff]
  %v356 = vld [vmem:[%s330 + $0xc8] sm:$0xff]
  %v357 = vld [vmem:[%s330 + $0xd0] sm:$0xff]
  %v358 = vld [vmem:[%s330 + $0xd8] sm:$0xff]
  %v359 = vld [vmem:[%s330 + $0xe0] sm:$0xff]
  %v360 = vld [vmem:[%s330 + $0xe8] sm:$0xff]
  %v361 = vld [vmem:[%s330 + $0xf0] sm:$0xff]
  %v362 = vld [vmem:[%s330 + $0xf8] sm:$0xff]
  %363 = vmatpush.msra.mxu0 %v346
  %364 = vmatpush.msra.mxu0 %v345
  %365 = vmatpush.msra.mxu0 %v344
  %366 = vmatpush.msra.mxu0 %v343
  %367 = vmatpush.msra.mxu0 %v342
  %368 = vmatpush.msra.mxu0 %v341
  %369 = vmatpush.msra.mxu0 %v340
  %370 = vmatpush.msra.mxu0 %v339
  %371 = vmatpush.msra.mxu0 %v338
  %372 = vmatpush.msra.mxu0 %v337
  %373 = vmatpush.msra.mxu0 %v336
  %374 = vmatpush.msra.mxu0 %v335
  %375 = vmatpush.msra.mxu0 %v334
  %376 = vmatpush.msra.mxu0 %v333
  %377 = vmatpush.msra.mxu0 %v332
  %378 = vmatpush.msra.mxu0 %v331
  %379 = vmatmul.f32.gmra.mxu0 %v106
  %v380 = vpop.f32.mrf.mxu0
  %v381 = vadd.f32 0.0, %v380
  %382 = vdwg.mxu0
  %383 = vmatpush.msra.mxu0 %v362
  %384 = vmatpush.msra.mxu0 %v361
  %385 = vmatpush.msra.mxu0 %v360
  %386 = vmatpush.msra.mxu0 %v359
  %387 = vmatpush.msra.mxu0 %v358
  %388 = vmatpush.msra.mxu0 %v357
  %389 = vmatpush.msra.mxu0 %v356
  %390 = vmatpush.msra.mxu0 %v355
  %391 = vmatpush.msra.mxu0 %v354
  %392 = vmatpush.msra.mxu0 %v353
  %393 = vmatpush.msra.mxu0 %v352
  %394 = vmatpush.msra.mxu0 %v351
  %395 = vmatpush.msra.mxu0 %v350
  %396 = vmatpush.msra.mxu0 %v349
  %397 = vmatpush.msra.mxu0 %v348
  %398 = vmatpush.msra.mxu0 %v347
  %399 = vmatmul.f32.gmra.mxu0 %v107
  %v400 = vpop.f32.mrf.mxu0
  %v401 = vadd.f32 %v381, %v400
  %402 = vdwg.mxu0
  %v403 = vmax.f32 %v329, %v401
  %v404 = vld [vmem:[%s4] sm:$0xff]
  %v405 = vld [vmem:[%s4 + $0x8] sm:$0xff]
  %v406 = vld [vmem:[%s6] sm:$0xff]
  %v407 = vld [vmem:[%s6 + $0x8] sm:$0xff]
  %v408 = vld [vmem:[%s6 + $0x10] sm:$0xff]
  %v409 = vld [vmem:[%s6 + $0x18] sm:$0xff]
  %v410 = vld [vmem:[%s6 + $0x20] sm:$0xff]
  %v411 = vld [vmem:[%s6 + $0x28] sm:$0xff]
  %v412 = vld [vmem:[%s6 + $0x30] sm:$0xff]
  %v413 = vld [vmem:[%s6 + $0x38] sm:$0xff]
  %vm414 = vcmask 523264
  %v416 = vsel %vm414, %v403, 0
  %418 = vmatpush.msra.mxu0 0.0
  %419 = vmatpush.msra.mxu0 0.0
  %420 = vmatpush.msra.mxu0 0.0
  %421 = vmatpush.msra.mxu0 0.0
  %422 = vmatpush.msra.mxu0 0.0
  %423 = vmatpush.msra.mxu0 0.0
  %424 = vmatpush.msra.mxu0 0.0
  %425 = vmatpush.msra.mxu0 0.0
  %426 = vmatpush.msra.mxu0 %v413
  %427 = vmatpush.msra.mxu0 %v412
  %428 = vmatpush.msra.mxu0 %v411
  %429 = vmatpush.msra.mxu0 %v410
  %430 = vmatpush.msra.mxu0 %v409
  %431 = vmatpush.msra.mxu0 %v408
  %432 = vmatpush.msra.mxu0 %v407
  %433 = vmatpush.msra.mxu0 %v406
  %434 = vmatmul.f32.gmra.mxu0 %v416
  %v435 = vpop.f32.mrf.mxu0
  %v436 = vadd.f32 0.0, %v435
  %437 = vdwg.mxu0
  %s438 = scalar_lea.vmem %s6, 64
  %v439 = vld [vmem:[%s438] sm:$0xff]
  %v440 = vld [vmem:[%s438 + $0x8] sm:$0xff]
  %v441 = vld [vmem:[%s438 + $0x10] sm:$0xff]
  %v442 = vld [vmem:[%s438 + $0x18] sm:$0xff]
  %v443 = vld [vmem:[%s438 + $0x20] sm:$0xff]
  %v444 = vld [vmem:[%s438 + $0x28] sm:$0xff]
  %v445 = vld [vmem:[%s438 + $0x30] sm:$0xff]
  %v446 = vld [vmem:[%s438 + $0x38] sm:$0xff]
  %447 = vmatpush.msra.mxu0 0.0
  %448 = vmatpush.msra.mxu0 0.0
  %449 = vmatpush.msra.mxu0 0.0
  %450 = vmatpush.msra.mxu0 0.0
  %451 = vmatpush.msra.mxu0 0.0
  %452 = vmatpush.msra.mxu0 0.0
  %453 = vmatpush.msra.mxu0 0.0
  %454 = vmatpush.msra.mxu0 0.0
  %455 = vmatpush.msra.mxu0 %v446
  %456 = vmatpush.msra.mxu0 %v445
  %457 = vmatpush.msra.mxu0 %v444
  %458 = vmatpush.msra.mxu0 %v443
  %459 = vmatpush.msra.mxu0 %v442
  %460 = vmatpush.msra.mxu0 %v441
  %461 = vmatpush.msra.mxu0 %v440
  %462 = vmatpush.msra.mxu0 %v439
  %463 = vmatmul.f32.gmra.mxu0 %v416
  %v464 = vpop.f32.mrf.mxu0
  %v465 = vadd.f32 0.0, %v464
  %466 = vdwg.mxu0
  %s467 = scalar_lea.vmem %s4, 16
  %v468 = vld [vmem:[%s467] sm:$0xff]
  %v469 = vld [vmem:[%s467 + $0x8] sm:$0xff]
  %vm470 = vcmask 64512
  %v472 = vsel %vm470, %v468, 0
  %v475 = vsel %vm470, %v469, 0
  %477 = vmatpush.msra.mxu0 0.0
  %478 = vmatpush.msra.mxu0 0.0
  %479 = vmatpush.msra.mxu0 0.0
  %480 = vmatpush.msra.mxu0 0.0
  %481 = vmatpush.msra.mxu0 0.0
  %482 = vmatpush.msra.mxu0 0.0
  %483 = vmatpush.msra.mxu0 0.0
  %484 = vmatpush.msra.mxu0 0.0
  %485 = vmatpush.msra.mxu0 0.0
  %486 = vmatpush.msra.mxu0 0.0
  %487 = vmatpush.msra.mxu0 0.0
  %488 = vmatpush.msra.mxu0 0.0
  %489 = vmatpush.msra.mxu0 0.0
  %490 = vmatpush.msra.mxu0 0.0
  %491 = vmatpush.msra.mxu0 0.0
  %492 = vmatpush.msra.mxu0 %v465
  %493 = vmatmul.f32.gmra.mxu0 %v472
  %v494 = vpop.f32.mrf.mxu0
  %v495 = vadd.f32 0.0, %v494
  %496 = vmatmul.f32.gmra.mxu0 %v475
  %v497 = vpop.f32.mrf.mxu0
  %v498 = vadd.f32 0.0, %v497
  %499 = vdwg.mxu0
  %v501 = vsel %vm470, %v404, 0
  %v504 = vsel %vm470, %v405, 0
  %506 = vmatpush.msra.mxu0 0.0
  %507 = vmatpush.msra.mxu0 0.0
  %508 = vmatpush.msra.mxu0 0.0
  %509 = vmatpush.msra.mxu0 0.0
  %510 = vmatpush.msra.mxu0 0.0
  %511 = vmatpush.msra.mxu0 0.0
  %512 = vmatpush.msra.mxu0 0.0
  %513 = vmatpush.msra.mxu0 0.0
  %514 = vmatpush.msra.mxu0 0.0
  %515 = vmatpush.msra.mxu0 0.0
  %516 = vmatpush.msra.mxu0 0.0
  %517 = vmatpush.msra.mxu0 0.0
  %518 = vmatpush.msra.mxu0 0.0
  %519 = vmatpush.msra.mxu0 0.0
  %520 = vmatpush.msra.mxu0 0.0
  %521 = vmatpush.msra.mxu0 %v436
  %522 = vmatmul.f32.gmra.mxu0 %v501
  %v523 = vpop.f32.mrf.mxu0
  %v524 = vadd.f32 %v495, %v523
  %525 = vmatmul.f32.gmra.mxu0 %v504
  %v526 = vpop.f32.mrf.mxu0
  %v527 = vadd.f32 %v498, %v526
  %528 = vdwg.mxu0
  %s529 = scalar_lea.vmem %s6, 128
  %v530 = vld [vmem:[%s529] sm:$0xff]
  %v531 = vld [vmem:[%s529 + $0x8] sm:$0xff]
  %v532 = vld [vmem:[%s529 + $0x10] sm:$0xff]
  %v533 = vld [vmem:[%s529 + $0x18] sm:$0xff]
  %v534 = vld [vmem:[%s529 + $0x20] sm:$0xff]
  %v535 = vld [vmem:[%s529 + $0x28] sm:$0xff]
  %v536 = vld [vmem:[%s529 + $0x30] sm:$0xff]
  %v537 = vld [vmem:[%s529 + $0x38] sm:$0xff]
  %538 = vmatpush.msra.mxu0 0.0
  %539 = vmatpush.msra.mxu0 0.0
  %540 = vmatpush.msra.mxu0 0.0
  %541 = vmatpush.msra.mxu0 0.0
  %542 = vmatpush.msra.mxu0 0.0
  %543 = vmatpush.msra.mxu0 0.0
  %544 = vmatpush.msra.mxu0 0.0
  %545 = vmatpush.msra.mxu0 0.0
  %546 = vmatpush.msra.mxu0 %v537
  %547 = vmatpush.msra.mxu0 %v536
  %548 = vmatpush.msra.mxu0 %v535
  %549 = vmatpush.msra.mxu0 %v534
  %550 = vmatpush.msra.mxu0 %v533
  %551 = vmatpush.msra.mxu0 %v532
  %552 = vmatpush.msra.mxu0 %v531
  %553 = vmatpush.msra.mxu0 %v530
  %554 = vmatmul.f32.gmra.mxu0 %v416
  %v555 = vpop.f32.mrf.mxu0
  %v556 = vadd.f32 0.0, %v555
  %557 = vdwg.mxu0
  %s558 = scalar_lea.vmem %s4, 32
  %v559 = vld [vmem:[%s558] sm:$0xff]
  %v560 = vld [vmem:[%s558 + $0x8] sm:$0xff]
  %v562 = vsel %vm470, %v559, 0
  %v565 = vsel %vm470, %v560, 0
  %567 = vmatpush.msra.mxu0 0.0
  %568 = vmatpush.msra.mxu0 0.0
  %569 = vmatpush.msra.mxu0 0.0
  %570 = vmatpush.msra.mxu0 0.0
  %571 = vmatpush.msra.mxu0 0.0
  %572 = vmatpush.msra.mxu0 0.0
  %573 = vmatpush.msra.mxu0 0.0
  %574 = vmatpush.msra.mxu0 0.0
  %575 = vmatpush.msra.mxu0 0.0
  %576 = vmatpush.msra.mxu0 0.0
  %577 = vmatpush.msra.mxu0 0.0
  %578 = vmatpush.msra.mxu0 0.0
  %579 = vmatpush.msra.mxu0 0.0
  %580 = vmatpush.msra.mxu0 0.0
  %581 = vmatpush.msra.mxu0 0.0
  %582 = vmatpush.msra.mxu0 %v556
  %583 = vmatmul.f32.gmra.mxu0 %v562
  %v584 = vpop.f32.mrf.mxu0
  %v585 = vadd.f32 0.0, %v584
  %586 = vmatmul.f32.gmra.mxu0 %v565
  %v587 = vpop.f32.mrf.mxu0
  %v588 = vadd.f32 0.0, %v587
  %589 = vdwg.mxu0
  %v590 = vadd.f32 %v524, %v585
  %v591 = vadd.f32 %v527, %v588
  %s592 = scalar_lea.vmem %s6, 192
  %v593 = vld [vmem:[%s592] sm:$0xff]
  %v594 = vld [vmem:[%s592 + $0x8] sm:$0xff]
  %v595 = vld [vmem:[%s592 + $0x10] sm:$0xff]
  %v596 = vld [vmem:[%s592 + $0x18] sm:$0xff]
  %v597 = vld [vmem:[%s592 + $0x20] sm:$0xff]
  %v598 = vld [vmem:[%s592 + $0x28] sm:$0xff]
  %v599 = vld [vmem:[%s592 + $0x30] sm:$0xff]
  %v600 = vld [vmem:[%s592 + $0x38] sm:$0xff]
  %601 = vmatpush.msra.mxu0 0.0
  %602 = vmatpush.msra.mxu0 0.0
  %603 = vmatpush.msra.mxu0 0.0
  %604 = vmatpush.msra.mxu0 0.0
  %605 = vmatpush.msra.mxu0 0.0
  %606 = vmatpush.msra.mxu0 0.0
  %607 = vmatpush.msra.mxu0 0.0
  %608 = vmatpush.msra.mxu0 0.0
  %609 = vmatpush.msra.mxu0 %v600
  %610 = vmatpush.msra.mxu0 %v599
  %611 = vmatpush.msra.mxu0 %v598
  %612 = vmatpush.msra.mxu0 %v597
  %613 = vmatpush.msra.mxu0 %v596
  %614 = vmatpush.msra.mxu0 %v595
  %615 = vmatpush.msra.mxu0 %v594
  %616 = vmatpush.msra.mxu0 %v593
  %617 = vmatmul.f32.gmra.mxu0 %v416
  %v618 = vpop.f32.mrf.mxu0
  %v619 = vadd.f32 0.0, %v618
  %620 = vdwg.mxu0
  %s621 = scalar_lea.vmem %s4, 48
  %v622 = vld [vmem:[%s621] sm:$0xff]
  %v623 = vld [vmem:[%s621 + $0x8] sm:$0xff]
  %v625 = vsel %vm470, %v622, 0
  %v628 = vsel %vm470, %v623, 0
  %630 = vmatpush.msra.mxu0 0.0
  %631 = vmatpush.msra.mxu0 0.0
  %632 = vmatpush.msra.mxu0 0.0
  %633 = vmatpush.msra.mxu0 0.0
  %634 = vmatpush.msra.mxu0 0.0
  %635 = vmatpush.msra.mxu0 0.0
  %636 = vmatpush.msra.mxu0 0.0
  %637 = vmatpush.msra.mxu0 0.0
  %638 = vmatpush.msra.mxu0 0.0
  %639 = vmatpush.msra.mxu0 0.0
  %640 = vmatpush.msra.mxu0 0.0
  %641 = vmatpush.msra.mxu0 0.0
  %642 = vmatpush.msra.mxu0 0.0
  %643 = vmatpush.msra.mxu0 0.0
  %644 = vmatpush.msra.mxu0 0.0
  %645 = vmatpush.msra.mxu0 %v619
  %646 = vmatmul.f32.gmra.mxu0 %v625
  %v647 = vpop.f32.mrf.mxu0
  %v648 = vadd.f32 0.0, %v647
  %649 = vmatmul.f32.gmra.mxu0 %v628
  %v650 = vpop.f32.mrf.mxu0
  %v651 = vadd.f32 0.0, %v650
  %652 = vdwg.mxu0
  %v653 = vadd.f32 %v590, %v648
  %v654 = vadd.f32 %v591, %v651
  %s655 = scalar_lea.vmem %s6, 256
  %v656 = vld [vmem:[%s655] sm:$0xff]
  %v657 = vld [vmem:[%s655 + $0x8] sm:$0xff]
  %v658 = vld [vmem:[%s655 + $0x10] sm:$0xff]
  %v659 = vld [vmem:[%s655 + $0x18] sm:$0xff]
  %v660 = vld [vmem:[%s655 + $0x20] sm:$0xff]
  %v661 = vld [vmem:[%s655 + $0x28] sm:$0xff]
  %v662 = vld [vmem:[%s655 + $0x30] sm:$0xff]
  %v663 = vld [vmem:[%s655 + $0x38] sm:$0xff]
  %664 = vmatpush.msra.mxu0 0.0
  %665 = vmatpush.msra.mxu0 0.0
  %666 = vmatpush.msra.mxu0 0.0
  %667 = vmatpush.msra.mxu0 0.0
  %668 = vmatpush.msra.mxu0 0.0
  %669 = vmatpush.msra.mxu0 0.0
  %670 = vmatpush.msra.mxu0 0.0
  %671 = vmatpush.msra.mxu0 0.0
  %672 = vmatpush.msra.mxu0 %v663
  %673 = vmatpush.msra.mxu0 %v662
  %674 = vmatpush.msra.mxu0 %v661
  %675 = vmatpush.msra.mxu0 %v660
  %676 = vmatpush.msra.mxu0 %v659
  %677 = vmatpush.msra.mxu0 %v658
  %678 = vmatpush.msra.mxu0 %v657
  %679 = vmatpush.msra.mxu0 %v656
  %680 = vmatmul.f32.gmra.mxu0 %v416
  %v681 = vpop.f32.mrf.mxu0
  %v682 = vadd.f32 0.0, %v681
  %683 = vdwg.mxu0
  %s684 = scalar_lea.vmem %s4, 64
  %v685 = vld [vmem:[%s684] sm:$0xff]
  %v686 = vld [vmem:[%s684 + $0x8] sm:$0xff]
  %v688 = vsel %vm470, %v685, 0
  %v691 = vsel %vm470, %v686, 0
  %693 = vmatpush.msra.mxu0 0.0
  %694 = vmatpush.msra.mxu0 0.0
  %695 = vmatpush.msra.mxu0 0.0
  %696 = vmatpush.msra.mxu0 0.0
  %697 = vmatpush.msra.mxu0 0.0
  %698 = vmatpush.msra.mxu0 0.0
  %699 = vmatpush.msra.mxu0 0.0
  %700 = vmatpush.msra.mxu0 0.0
  %701 = vmatpush.msra.mxu0 0.0
  %702 = vmatpush.msra.mxu0 0.0
  %703 = vmatpush.msra.mxu0 0.0
  %704 = vmatpush.msra.mxu0 0.0
  %705 = vmatpush.msra.mxu0 0.0
  %706 = vmatpush.msra.mxu0 0.0
  %707 = vmatpush.msra.mxu0 0.0
  %708 = vmatpush.msra.mxu0 %v682
  %709 = vmatmul.f32.gmra.mxu0 %v688
  %v710 = vpop.f32.mrf.mxu0
  %v711 = vadd.f32 0.0, %v710
  %712 = vmatmul.f32.gmra.mxu0 %v691
  %v713 = vpop.f32.mrf.mxu0
  %v714 = vadd.f32 0.0, %v713
  %715 = vdwg.mxu0
  %v716 = vadd.f32 %v653, %v711
  %v717 = vadd.f32 %v654, %v714
  %s718 = scalar_lea.vmem %s6, 320
  %v719 = vld [vmem:[%s718] sm:$0xff]
  %v720 = vld [vmem:[%s718 + $0x8] sm:$0xff]
  %v721 = vld [vmem:[%s718 + $0x10] sm:$0xff]
  %v722 = vld [vmem:[%s718 + $0x18] sm:$0xff]
  %v723 = vld [vmem:[%s718 + $0x20] sm:$0xff]
  %v724 = vld [vmem:[%s718 + $0x28] sm:$0xff]
  %v725 = vld [vmem:[%s718 + $0x30] sm:$0xff]
  %v726 = vld [vmem:[%s718 + $0x38] sm:$0xff]
  %727 = vmatpush.msra.mxu0 0.0
  %728 = vmatpush.msra.mxu0 0.0
  %729 = vmatpush.msra.mxu0 0.0
  %730 = vmatpush.msra.mxu0 0.0
  %731 = vmatpush.msra.mxu0 0.0
  %732 = vmatpush.msra.mxu0 0.0
  %733 = vmatpush.msra.mxu0 0.0
  %734 = vmatpush.msra.mxu0 0.0
  %735 = vmatpush.msra.mxu0 %v726
  %736 = vmatpush.msra.mxu0 %v725
  %737 = vmatpush.msra.mxu0 %v724
  %738 = vmatpush.msra.mxu0 %v723
  %739 = vmatpush.msra.mxu0 %v722
  %740 = vmatpush.msra.mxu0 %v721
  %741 = vmatpush.msra.mxu0 %v720
  %742 = vmatpush.msra.mxu0 %v719
  %743 = vmatmul.f32.gmra.mxu0 %v416
  %v744 = vpop.f32.mrf.mxu0
  %v745 = vadd.f32 0.0, %v744
  %746 = vdwg.mxu0
  %s747 = scalar_lea.vmem %s4, 80
  %v748 = vld [vmem:[%s747] sm:$0xff]
  %v749 = vld [vmem:[%s747 + $0x8] sm:$0xff]
  %v751 = vsel %vm470, %v748, 0
  %v754 = vsel %vm470, %v749, 0
  %756 = vmatpush.msra.mxu0 0.0
  %757 = vmatpush.msra.mxu0 0.0
  %758 = vmatpush.msra.mxu0 0.0
  %759 = vmatpush.msra.mxu0 0.0
  %760 = vmatpush.msra.mxu0 0.0
  %761 = vmatpush.msra.mxu0 0.0
  %762 = vmatpush.msra.mxu0 0.0
  %763 = vmatpush.msra.mxu0 0.0
  %764 = vmatpush.msra.mxu0 0.0
  %765 = vmatpush.msra.mxu0 0.0
  %766 = vmatpush.msra.mxu0 0.0
  %767 = vmatpush.msra.mxu0 0.0
  %768 = vmatpush.msra.mxu0 0.0
  %769 = vmatpush.msra.mxu0 0.0
  %770 = vmatpush.msra.mxu0 0.0
  %771 = vmatpush.msra.mxu0 %v745
  %772 = vmatmul.f32.gmra.mxu0 %v751
  %v773 = vpop.f32.mrf.mxu0
  %v774 = vadd.f32 0.0, %v773
  %775 = vmatmul.f32.gmra.mxu0 %v754
  %v776 = vpop.f32.mrf.mxu0
  %v777 = vadd.f32 0.0, %v776
  %778 = vdwg.mxu0
  %v779 = vadd.f32 %v716, %v774
  %v780 = vadd.f32 %v717, %v777
  %s781 = scalar_lea.vmem %s6, 384
  %v782 = vld [vmem:[%s781] sm:$0xff]
  %v783 = vld [vmem:[%s781 + $0x8] sm:$0xff]
  %v784 = vld [vmem:[%s781 + $0x10] sm:$0xff]
  %v785 = vld [vmem:[%s781 + $0x18] sm:$0xff]
  %v786 = vld [vmem:[%s781 + $0x20] sm:$0xff]
  %v787 = vld [vmem:[%s781 + $0x28] sm:$0xff]
  %v788 = vld [vmem:[%s781 + $0x30] sm:$0xff]
  %v789 = vld [vmem:[%s781 + $0x38] sm:$0xff]
  %790 = vmatpush.msra.mxu0 0.0
  %791 = vmatpush.msra.mxu0 0.0
  %792 = vmatpush.msra.mxu0 0.0
  %793 = vmatpush.msra.mxu0 0.0
  %794 = vmatpush.msra.mxu0 0.0
  %795 = vmatpush.msra.mxu0 0.0
  %796 = vmatpush.msra.mxu0 0.0
  %797 = vmatpush.msra.mxu0 0.0
  %798 = vmatpush.msra.mxu0 %v789
  %799 = vmatpush.msra.mxu0 %v788
  %800 = vmatpush.msra.mxu0 %v787
  %801 = vmatpush.msra.mxu0 %v786
  %802 = vmatpush.msra.mxu0 %v785
  %803 = vmatpush.msra.mxu0 %v784
  %804 = vmatpush.msra.mxu0 %v783
  %805 = vmatpush.msra.mxu0 %v782
  %806 = vmatmul.f32.gmra.mxu0 %v416
  %v807 = vpop.f32.mrf.mxu0
  %v808 = vadd.f32 0.0, %v807
  %809 = vdwg.mxu0
  %s810 = scalar_lea.vmem %s4, 96
  %v811 = vld [vmem:[%s810] sm:$0xff]
  %v812 = vld [vmem:[%s810 + $0x8] sm:$0xff]
  %v814 = vsel %vm470, %v811, 0
  %v817 = vsel %vm470, %v812, 0
  %819 = vmatpush.msra.mxu0 0.0
  %820 = vmatpush.msra.mxu0 0.0
  %821 = vmatpush.msra.mxu0 0.0
  %822 = vmatpush.msra.mxu0 0.0
  %823 = vmatpush.msra.mxu0 0.0
  %824 = vmatpush.msra.mxu0 0.0
  %825 = vmatpush.msra.mxu0 0.0
  %826 = vmatpush.msra.mxu0 0.0
  %827 = vmatpush.msra.mxu0 0.0
  %828 = vmatpush.msra.mxu0 0.0
  %829 = vmatpush.msra.mxu0 0.0
  %830 = vmatpush.msra.mxu0 0.0
  %831 = vmatpush.msra.mxu0 0.0
  %832 = vmatpush.msra.mxu0 0.0
  %833 = vmatpush.msra.mxu0 0.0
  %834 = vmatpush.msra.mxu0 %v808
  %835 = vmatmul.f32.gmra.mxu0 %v814
  %v836 = vpop.f32.mrf.mxu0
  %v837 = vadd.f32 0.0, %v836
  %838 = vmatmul.f32.gmra.mxu0 %v817
  %v839 = vpop.f32.mrf.mxu0
  %v840 = vadd.f32 0.0, %v839
  %841 = vdwg.mxu0
  %v842 = vadd.f32 %v779, %v837
  %v843 = vadd.f32 %v780, %v840
  %s844 = scalar_lea.vmem %s6, 448
  %v845 = vld [vmem:[%s844] sm:$0xff]
  %v846 = vld [vmem:[%s844 + $0x8] sm:$0xff]
  %v847 = vld [vmem:[%s844 + $0x10] sm:$0xff]
  %v848 = vld [vmem:[%s844 + $0x18] sm:$0xff]
  %v849 = vld [vmem:[%s844 + $0x20] sm:$0xff]
  %v850 = vld [vmem:[%s844 + $0x28] sm:$0xff]
  %v851 = vld [vmem:[%s844 + $0x30] sm:$0xff]
  %v852 = vld [vmem:[%s844 + $0x38] sm:$0xff]
  %853 = vmatpush.msra.mxu0 0.0
  %854 = vmatpush.msra.mxu0 0.0
  %855 = vmatpush.msra.mxu0 0.0
  %856 = vmatpush.msra.mxu0 0.0
  %857 = vmatpush.msra.mxu0 0.0
  %858 = vmatpush.msra.mxu0 0.0
  %859 = vmatpush.msra.mxu0 0.0
  %860 = vmatpush.msra.mxu0 0.0
  %861 = vmatpush.msra.mxu0 %v852
  %862 = vmatpush.msra.mxu0 %v851
  %863 = vmatpush.msra.mxu0 %v850
  %864 = vmatpush.msra.mxu0 %v849
  %865 = vmatpush.msra.mxu0 %v848
  %866 = vmatpush.msra.mxu0 %v847
  %867 = vmatpush.msra.mxu0 %v846
  %868 = vmatpush.msra.mxu0 %v845
  %869 = vmatmul.f32.gmra.mxu0 %v416
  %v870 = vpop.f32.mrf.mxu0
  %v871 = vadd.f32 0.0, %v870
  %872 = vdwg.mxu0
  %s873 = scalar_lea.vmem %s4, 112
  %v874 = vld [vmem:[%s873] sm:$0xff]
  %v875 = vld [vmem:[%s873 + $0x8] sm:$0xff]
  %v877 = vsel %vm470, %v874, 0
  %v880 = vsel %vm470, %v875, 0
  %882 = vmatpush.msra.mxu0 0.0
  %883 = vmatpush.msra.mxu0 0.0
  %884 = vmatpush.msra.mxu0 0.0
  %885 = vmatpush.msra.mxu0 0.0
  %886 = vmatpush.msra.mxu0 0.0
  %887 = vmatpush.msra.mxu0 0.0
  %888 = vmatpush.msra.mxu0 0.0
  %889 = vmatpush.msra.mxu0 0.0
  %890 = vmatpush.msra.mxu0 0.0
  %891 = vmatpush.msra.mxu0 0.0
  %892 = vmatpush.msra.mxu0 0.0
  %893 = vmatpush.msra.mxu0 0.0
  %894 = vmatpush.msra.mxu0 0.0
  %895 = vmatpush.msra.mxu0 0.0
  %896 = vmatpush.msra.mxu0 0.0
  %897 = vmatpush.msra.mxu0 %v871
  %898 = vmatmul.f32.gmra.mxu0 %v877
  %v899 = vpop.f32.mrf.mxu0
  %v900 = vadd.f32 0.0, %v899
  %901 = vmatmul.f32.gmra.mxu0 %v880
  %v902 = vpop.f32.mrf.mxu0
  %v903 = vadd.f32 0.0, %v902
  %904 = vdwg.mxu0
  %v905 = vadd.f32 %v842, %v900
  %v906 = vadd.f32 %v843, %v903
  %s907 = scalar_lea.vmem %s6, 512
  %v908 = vld [vmem:[%s907] sm:$0xff]
  %v909 = vld [vmem:[%s907 + $0x8] sm:$0xff]
  %v910 = vld [vmem:[%s907 + $0x10] sm:$0xff]
  %v911 = vld [vmem:[%s907 + $0x18] sm:$0xff]
  %v912 = vld [vmem:[%s907 + $0x20] sm:$0xff]
  %v913 = vld [vmem:[%s907 + $0x28] sm:$0xff]
  %v914 = vld [vmem:[%s907 + $0x30] sm:$0xff]
  %v915 = vld [vmem:[%s907 + $0x38] sm:$0xff]
  %916 = vmatpush.msra.mxu0 0.0
  %917 = vmatpush.msra.mxu0 0.0
  %918 = vmatpush.msra.mxu0 0.0
  %919 = vmatpush.msra.mxu0 0.0
  %920 = vmatpush.msra.mxu0 0.0
  %921 = vmatpush.msra.mxu0 0.0
  %922 = vmatpush.msra.mxu0 0.0
  %923 = vmatpush.msra.mxu0 0.0
  %924 = vmatpush.msra.mxu0 %v915
  %925 = vmatpush.msra.mxu0 %v914
  %926 = vmatpush.msra.mxu0 %v913
  %927 = vmatpush.msra.mxu0 %v912
  %928 = vmatpush.msra.mxu0 %v911
  %929 = vmatpush.msra.mxu0 %v910
  %930 = vmatpush.msra.mxu0 %v909
  %931 = vmatpush.msra.mxu0 %v908
  %932 = vmatmul.f32.gmra.mxu0 %v416
  %v933 = vpop.f32.mrf.mxu0
  %v934 = vadd.f32 0.0, %v933
  %935 = vdwg.mxu0
  %s936 = scalar_lea.vmem %s4, 128
  %v937 = vld [vmem:[%s936] sm:$0xff]
  %v938 = vld [vmem:[%s936 + $0x8] sm:$0xff]
  %v940 = vsel %vm470, %v937, 0
  %v943 = vsel %vm470, %v938, 0
  %945 = vmatpush.msra.mxu0 0.0
  %946 = vmatpush.msra.mxu0 0.0
  %947 = vmatpush.msra.mxu0 0.0
  %948 = vmatpush.msra.mxu0 0.0
  %949 = vmatpush.msra.mxu0 0.0
  %950 = vmatpush.msra.mxu0 0.0
  %951 = vmatpush.msra.mxu0 0.0
  %952 = vmatpush.msra.mxu0 0.0
  %953 = vmatpush.msra.mxu0 0.0
  %954 = vmatpush.msra.mxu0 0.0
  %955 = vmatpush.msra.mxu0 0.0
  %956 = vmatpush.msra.mxu0 0.0
  %957 = vmatpush.msra.mxu0 0.0
  %958 = vmatpush.msra.mxu0 0.0
  %959 = vmatpush.msra.mxu0 0.0
  %960 = vmatpush.msra.mxu0 %v934
  %961 = vmatmul.f32.gmra.mxu0 %v940
  %v962 = vpop.f32.mrf.mxu0
  %v963 = vadd.f32 0.0, %v962
  %964 = vmatmul.f32.gmra.mxu0 %v943
  %v965 = vpop.f32.mrf.mxu0
  %v966 = vadd.f32 0.0, %v965
  %967 = vdwg.mxu0
  %v968 = vadd.f32 %v905, %v963
  %v969 = vadd.f32 %v906, %v966
  %v970 = vld [vmem:[%s5] sm:$0xff]
  %v971 = vld [vmem:[%s5 + $0x8] sm:$0xff]
  %973 = vset.pattern.permute.xlu0 0
  %974 = vperm.xlu0 %973, %v970
  %v975 = vpop.permute.xlu0 %974
  %978 = vset.pattern.permute.xlu0 0
  %979 = vperm.xlu0 %978, %v971
  %v980 = vpop.permute.xlu0 %979
  %v982 = vadd.f32 %v968, %v975
  %v983 = vadd.f32 %v969, %v980
  %v984 = vmax.f32 %v982, 0.0
  %v985 = vmax.f32 %v983, 0.0
  %v986 = vld [vmem:[%s7] sm:$0xff]
  %v987 = vld [vmem:[%s7 + $0x8] sm:$0xff]
  %v988 = vld [vmem:[%s7 + $0x10] sm:$0xff]
  %v989 = vld [vmem:[%s7 + $0x18] sm:$0xff]
  %v990 = vld [vmem:[%s7 + $0x20] sm:$0xff]
  %v991 = vld [vmem:[%s7 + $0x28] sm:$0xff]
  %v992 = vld [vmem:[%s7 + $0x30] sm:$0xff]
  %v993 = vld [vmem:[%s7 + $0x38] sm:$0xff]
  %v995 = vsel %vm414, %v984, 0
  %v998 = vsel %vm414, %v985, 0
  %1000 = vmatpush.msra.mxu0 0.0
  %1001 = vmatpush.msra.mxu0 0.0
  %1002 = vmatpush.msra.mxu0 0.0
  %1003 = vmatpush.msra.mxu0 0.0
  %1004 = vmatpush.msra.mxu0 0.0
  %1005 = vmatpush.msra.mxu0 0.0
  %1006 = vmatpush.msra.mxu0 0.0
  %1007 = vmatpush.msra.mxu0 0.0
  %1008 = vmatpush.msra.mxu0 %v993
  %1009 = vmatpush.msra.mxu0 %v992
  %1010 = vmatpush.msra.mxu0 %v991
  %1011 = vmatpush.msra.mxu0 %v990
  %1012 = vmatpush.msra.mxu0 %v989
  %1013 = vmatpush.msra.mxu0 %v988
  %1014 = vmatpush.msra.mxu0 %v987
  %1015 = vmatpush.msra.mxu0 %v986
  %1016 = vmatmul.f32.gmra.mxu0 %v995
  %v1017 = vpop.f32.mrf.mxu0
  %v1018 = vadd.f32 0.0, %v1017
  %1019 = vmatmul.f32.gmra.mxu0 %v998
  %v1020 = vpop.f32.mrf.mxu0
  %v1021 = vadd.f32 0.0, %v1020
  %1022 = vdwg.mxu0
  %s1023 = scalar_lea.vmem %s7, 64
  %v1024 = vld [vmem:[%s1023] sm:$0xff]
  %v1025 = vld [vmem:[%s1023 + $0x8] sm:$0xff]
  %v1026 = vld [vmem:[%s1023 + $0x10] sm:$0xff]
  %v1027 = vld [vmem:[%s1023 + $0x18] sm:$0xff]
  %v1028 = vld [vmem:[%s1023 + $0x20] sm:$0xff]
  %v1029 = vld [vmem:[%s1023 + $0x28] sm:$0xff]
  %v1030 = vld [vmem:[%s1023 + $0x30] sm:$0xff]
  %v1031 = vld [vmem:[%s1023 + $0x38] sm:$0xff]
  %1032 = vmatpush.msra.mxu0 0.0
  %1033 = vmatpush.msra.mxu0 0.0
  %1034 = vmatpush.msra.mxu0 0.0
  %1035 = vmatpush.msra.mxu0 0.0
  %1036 = vmatpush.msra.mxu0 0.0
  %1037 = vmatpush.msra.mxu0 0.0
  %1038 = vmatpush.msra.mxu0 0.0
  %1039 = vmatpush.msra.mxu0 0.0
  %1040 = vmatpush.msra.mxu0 %v1031
  %1041 = vmatpush.msra.mxu0 %v1030
  %1042 = vmatpush.msra.mxu0 %v1029
  %1043 = vmatpush.msra.mxu0 %v1028
  %1044 = vmatpush.msra.mxu0 %v1027
  %1045 = vmatpush.msra.mxu0 %v1026
  %1046 = vmatpush.msra.mxu0 %v1025
  %1047 = vmatpush.msra.mxu0 %v1024
  %1048 = vmatmul.f32.gmra.mxu0 %v995
  %v1049 = vpop.f32.mrf.mxu0
  %v1050 = vadd.f32 0.0, %v1049
  %1051 = vmatmul.f32.gmra.mxu0 %v998
  %v1052 = vpop.f32.mrf.mxu0
  %v1053 = vadd.f32 0.0, %v1052
  %1054 = vdwg.mxu0
  %v1055 = vmax.f32 %v1018, %v1050
  %v1056 = vmax.f32 %v1021, %v1053
  %s1057 = scalar_lea.vmem %s7, 128
  %v1058 = vld [vmem:[%s1057] sm:$0xff]
  %v1059 = vld [vmem:[%s1057 + $0x8] sm:$0xff]
  %v1060 = vld [vmem:[%s1057 + $0x10] sm:$0xff]
  %v1061 = vld [vmem:[%s1057 + $0x18] sm:$0xff]
  %v1062 = vld [vmem:[%s1057 + $0x20] sm:$0xff]
  %v1063 = vld [vmem:[%s1057 + $0x28] sm:$0xff]
  %v1064 = vld [vmem:[%s1057 + $0x30] sm:$0xff]
  %v1065 = vld [vmem:[%s1057 + $0x38] sm:$0xff]
  %1066 = vmatpush.msra.mxu0 0.0
  %1067 = vmatpush.msra.mxu0 0.0
  %1068 = vmatpush.msra.mxu0 0.0
  %1069 = vmatpush.msra.mxu0 0.0
  %1070 = vmatpush.msra.mxu0 0.0
  %1071 = vmatpush.msra.mxu0 0.0
  %1072 = vmatpush.msra.mxu0 0.0
  %1073 = vmatpush.msra.mxu0 0.0
  %1074 = vmatpush.msra.mxu0 %v1065
  %1075 = vmatpush.msra.mxu0 %v1064
  %1076 = vmatpush.msra.mxu0 %v1063
  %1077 = vmatpush.msra.mxu0 %v1062
  %1078 = vmatpush.msra.mxu0 %v1061
  %1079 = vmatpush.msra.mxu0 %v1060
  %1080 = vmatpush.msra.mxu0 %v1059
  %1081 = vmatpush.msra.mxu0 %v1058
  %1082 = vmatmul.f32.gmra.mxu0 %v995
  %v1083 = vpop.f32.mrf.mxu0
  %v1084 = vadd.f32 0.0, %v1083
  %1085 = vmatmul.f32.gmra.mxu0 %v998
  %v1086 = vpop.f32.mrf.mxu0
  %v1087 = vadd.f32 0.0, %v1086
  %1088 = vdwg.mxu0
  %v1089 = vmax.f32 %v1055, %v1084
  %v1090 = vmax.f32 %v1056, %v1087
  %s1091 = scalar_lea.vmem %s7, 192
  %v1092 = vld [vmem:[%s1091] sm:$0xff]
  %v1093 = vld [vmem:[%s1091 + $0x8] sm:$0xff]
  %v1094 = vld [vmem:[%s1091 + $0x10] sm:$0xff]
  %v1095 = vld [vmem:[%s1091 + $0x18] sm:$0xff]
  %v1096 = vld [vmem:[%s1091 + $0x20] sm:$0xff]
  %v1097 = vld [vmem:[%s1091 + $0x28] sm:$0xff]
  %v1098 = vld [vmem:[%s1091 + $0x30] sm:$0xff]
  %v1099 = vld [vmem:[%s1091 + $0x38] sm:$0xff]
  %1100 = vmatpush.msra.mxu0 0.0
  %1101 = vmatpush.msra.mxu0 0.0
  %1102 = vmatpush.msra.mxu0 0.0
  %1103 = vmatpush.msra.mxu0 0.0
  %1104 = vmatpush.msra.mxu0 0.0
  %1105 = vmatpush.msra.mxu0 0.0
  %1106 = vmatpush.msra.mxu0 0.0
  %1107 = vmatpush.msra.mxu0 0.0
  %1108 = vmatpush.msra.mxu0 %v1099
  %1109 = vmatpush.msra.mxu0 %v1098
  %1110 = vmatpush.msra.mxu0 %v1097
  %1111 = vmatpush.msra.mxu0 %v1096
  %1112 = vmatpush.msra.mxu0 %v1095
  %1113 = vmatpush.msra.mxu0 %v1094
  %1114 = vmatpush.msra.mxu0 %v1093
  %1115 = vmatpush.msra.mxu0 %v1092
  %1116 = vmatmul.f32.gmra.mxu0 %v995
  %v1117 = vpop.f32.mrf.mxu0
  %v1118 = vadd.f32 0.0, %v1117
  %1119 = vmatmul.f32.gmra.mxu0 %v998
  %v1120 = vpop.f32.mrf.mxu0
  %v1121 = vadd.f32 0.0, %v1120
  %1122 = vdwg.mxu0
  %v1123 = vmax.f32 %v1089, %v1118
  %v1124 = vmax.f32 %v1090, %v1121
  %vm1125 = vcmask 130048
  %1126 = vst.msk [vmem:[%s11] sm:$0xff] %vm1125, %v1123
  %1127 = vst.msk [vmem:[%s11 + $0x8] sm:$0xff] %vm1125, %v1124
  %v1128 = vld [vmem:[%s8] sm:$0xff]
  %v1129 = vld [vmem:[%s8 + $0x8] sm:$0xff]
  %v1130 = vld [vmem:[%s8 + $0x10] sm:$0xff]
  %v1131 = vld [vmem:[%s8 + $0x18] sm:$0xff]
  %v1132 = vld [vmem:[%s8 + $0x20] sm:$0xff]
  %v1133 = vld [vmem:[%s8 + $0x28] sm:$0xff]
  %v1134 = vld [vmem:[%s8 + $0x30] sm:$0xff]
  %v1135 = vld [vmem:[%s8 + $0x38] sm:$0xff]
  %v1136 = vld [vmem:[%s8 + $0x40] sm:$0xff]
  %v1137 = vld [vmem:[%s8 + $0x48] sm:$0xff]
  %v1138 = vld [vmem:[%s8 + $0x50] sm:$0xff]
  %v1139 = vld [vmem:[%s8 + $0x58] sm:$0xff]
  %v1140 = vld [vmem:[%s8 + $0x60] sm:$0xff]
  %v1141 = vld [vmem:[%s8 + $0x68] sm:$0xff]
  %v1142 = vld [vmem:[%s8 + $0x70] sm:$0xff]
  %v1143 = vld [vmem:[%s8 + $0x78] sm:$0xff]
  %v1144 = vld [vmem:[%s8 + $0x80] sm:$0xff]
  %v1145 = vld [vmem:[%s8 + $0x88] sm:$0xff]
  %v1146 = vld [vmem:[%s8 + $0x90] sm:$0xff]
  %v1147 = vld [vmem:[%s8 + $0x98] sm:$0xff]
  %v1148 = vld [vmem:[%s8 + $0xa0] sm:$0xff]
  %v1149 = vld [vmem:[%s8 + $0xa8] sm:$0xff]
  %v1150 = vld [vmem:[%s8 + $0xb0] sm:$0xff]
  %v1151 = vld [vmem:[%s8 + $0xb8] sm:$0xff]
  %v1152 = vld [vmem:[%s8 + $0xc0] sm:$0xff]
  %v1153 = vld [vmem:[%s8 + $0xc8] sm:$0xff]
  %v1154 = vld [vmem:[%s8 + $0xd0] sm:$0xff]
  %v1155 = vld [vmem:[%s8 + $0xd8] sm:$0xff]
  %v1156 = vld [vmem:[%s8 + $0xe0] sm:$0xff]
  %v1157 = vld [vmem:[%s8 + $0xe8] sm:$0xff]
  %v1158 = vld [vmem:[%s8 + $0xf0] sm:$0xff]
  %v1159 = vld [vmem:[%s8 + $0xf8] sm:$0xff]
  %v1160 = vld [vmem:[%s8 + $0x100] sm:$0xff]
  %v1161 = vld [vmem:[%s8 + $0x108] sm:$0xff]
  %v1162 = vld [vmem:[%s8 + $0x110] sm:$0xff]
  %v1163 = vld [vmem:[%s8 + $0x118] sm:$0xff]
  %v1164 = vld [vmem:[%s8 + $0x120] sm:$0xff]
  %v1165 = vld [vmem:[%s8 + $0x128] sm:$0xff]
  %v1166 = vld [vmem:[%s8 + $0x130] sm:$0xff]
  %v1167 = vld [vmem:[%s8 + $0x138] sm:$0xff]
  %v1168 = vld [vmem:[%s8 + $0x140] sm:$0xff]
  %v1169 = vld [vmem:[%s8 + $0x148] sm:$0xff]
  %v1170 = vld [vmem:[%s8 + $0x150] sm:$0xff]
  %v1171 = vld [vmem:[%s8 + $0x158] sm:$0xff]
  %v1172 = vld [vmem:[%s8 + $0x160] sm:$0xff]
  %v1173 = vld [vmem:[%s8 + $0x168] sm:$0xff]
  %v1174 = vld [vmem:[%s8 + $0x170] sm:$0xff]
  %v1175 = vld [vmem:[%s8 + $0x178] sm:$0xff]
  %v1176 = vld [vmem:[%s8 + $0x180] sm:$0xff]
  %v1177 = vld [vmem:[%s8 + $0x188] sm:$0xff]
  %v1178 = vld [vmem:[%s8 + $0x190] sm:$0xff]
  %v1179 = vld [vmem:[%s8 + $0x198] sm:$0xff]
  %v1180 = vld [vmem:[%s8 + $0x1a0] sm:$0xff]
  %v1181 = vld [vmem:[%s8 + $0x1a8] sm:$0xff]
  %v1182 = vld [vmem:[%s8 + $0x1b0] sm:$0xff]
  %v1183 = vld [vmem:[%s8 + $0x1b8] sm:$0xff]
  %v1184 = vld [vmem:[%s8 + $0x1c0] sm:$0xff]
  %v1185 = vld [vmem:[%s8 + $0x1c8] sm:$0xff]
  %v1186 = vld [vmem:[%s8 + $0x1d0] sm:$0xff]
  %v1187 = vld [vmem:[%s8 + $0x1d8] sm:$0xff]
  %v1188 = vld [vmem:[%s8 + $0x1e0] sm:$0xff]
  %v1189 = vld [vmem:[%s8 + $0x1e8] sm:$0xff]
  %v1190 = vld [vmem:[%s8 + $0x1f0] sm:$0xff]
  %v1191 = vld [vmem:[%s8 + $0x1f8] sm:$0xff]
  %v1192 = vmul.f32 %v1128, %v1123
  %v1193 = vmul.f32 %v1129, %v1124
  %v1194 = vmul.f32 %v1130, %v1123
  %v1195 = vmul.f32 %v1131, %v1124
  %v1196 = vmul.f32 %v1132, %v1123
  %v1197 = vmul.f32 %v1133, %v1124
  %v1198 = vmul.f32 %v1134, %v1123
  %v1199 = vmul.f32 %v1135, %v1124
  %v1200 = vmul.f32 %v1136, %v1123
  %v1201 = vmul.f32 %v1137, %v1124
  %v1202 = vmul.f32 %v1138, %v1123
  %v1203 = vmul.f32 %v1139, %v1124
  %v1204 = vmul.f32 %v1140, %v1123
  %v1205 = vmul.f32 %v1141, %v1124
  %v1206 = vmul.f32 %v1142, %v1123
  %v1207 = vmul.f32 %v1143, %v1124
  %v1208 = vmul.f32 %v1144, %v1123
  %v1209 = vmul.f32 %v1145, %v1124
  %v1210 = vmul.f32 %v1146, %v1123
  %v1211 = vmul.f32 %v1147, %v1124
  %v1212 = vmul.f32 %v1148, %v1123
  %v1213 = vmul.f32 %v1149, %v1124
  %v1214 = vmul.f32 %v1150, %v1123
  %v1215 = vmul.f32 %v1151, %v1124
  %v1216 = vmul.f32 %v1152, %v1123
  %v1217 = vmul.f32 %v1153, %v1124
  %v1218 = vmul.f32 %v1154, %v1123
  %v1219 = vmul.f32 %v1155, %v1124
  %v1220 = vmul.f32 %v1156, %v1123
  %v1221 = vmul.f32 %v1157, %v1124
  %v1222 = vmul.f32 %v1158, %v1123
  %v1223 = vmul.f32 %v1159, %v1124
  %v1224 = vmul.f32 %v1160, %v1123
  %v1225 = vmul.f32 %v1161, %v1124
  %v1226 = vmul.f32 %v1162, %v1123
  %v1227 = vmul.f32 %v1163, %v1124
  %v1228 = vmul.f32 %v1164, %v1123
  %v1229 = vmul.f32 %v1165, %v1124
  %v1230 = vmul.f32 %v1166, %v1123
  %v1231 = vmul.f32 %v1167, %v1124
  %v1232 = vmul.f32 %v1168, %v1123
  %v1233 = vmul.f32 %v1169, %v1124
  %v1234 = vmul.f32 %v1170, %v1123
  %v1235 = vmul.f32 %v1171, %v1124
  %v1236 = vmul.f32 %v1172, %v1123
  %v1237 = vmul.f32 %v1173, %v1124
  %v1238 = vmul.f32 %v1174, %v1123
  %v1239 = vmul.f32 %v1175, %v1124
  %v1240 = vmul.f32 %v1176, %v1123
  %v1241 = vmul.f32 %v1177, %v1124
  %v1242 = vmul.f32 %v1178, %v1123
  %v1243 = vmul.f32 %v1179, %v1124
  %v1244 = vmul.f32 %v1180, %v1123
  %v1245 = vmul.f32 %v1181, %v1124
  %v1246 = vmul.f32 %v1182, %v1123
  %v1247 = vmul.f32 %v1183, %v1124
  %v1248 = vmul.f32 %v1184, %v1123
  %v1249 = vmul.f32 %v1185, %v1124
  %v1250 = vmul.f32 %v1186, %v1123
  %v1251 = vmul.f32 %v1187, %v1124
  %v1252 = vmul.f32 %v1188, %v1123
  %v1253 = vmul.f32 %v1189, %v1124
  %v1254 = vmul.f32 %v1190, %v1123
  %v1255 = vmul.f32 %v1191, %v1124
  %v1256 = vld [vmem:[%s9] sm:$0xff]
  %v1257 = vld [vmem:[%s9 + $0x8] sm:$0xff]
  %v1258 = vld [vmem:[%s9 + $0x10] sm:$0xff]
  %v1259 = vld [vmem:[%s9 + $0x18] sm:$0xff]
  %v1260 = vsel %vm1125, %v1192, 0.0
  %1261 = vadd.xlane.f32.xlu0 %v1260
  %v1262 = vpop.xlane.xlu0 %1261
  %v1263 = vsel %vm1125, %v1193, 0.0
  %1264 = vadd.xlane.f32.xlu0 %v1263
  %v1265 = vpop.xlane.xlu0 %1264
  %v1266 = vsel %vm1125, %v1194, 0.0
  %1267 = vadd.xlane.f32.xlu0 %v1266
  %v1268 = vpop.xlane.xlu0 %1267
  %v1269 = vsel %vm1125, %v1195, 0.0
  %1270 = vadd.xlane.f32.xlu0 %v1269
  %v1271 = vpop.xlane.xlu0 %1270
  %v1272 = vsel %vm1125, %v1196, 0.0
  %1273 = vadd.xlane.f32.xlu0 %v1272
  %v1274 = vpop.xlane.xlu0 %1273
  %v1275 = vsel %vm1125, %v1197, 0.0
  %1276 = vadd.xlane.f32.xlu0 %v1275
  %v1277 = vpop.xlane.xlu0 %1276
  %v1278 = vsel %vm1125, %v1198, 0.0
  %1279 = vadd.xlane.f32.xlu0 %v1278
  %v1280 = vpop.xlane.xlu0 %1279
  %v1281 = vsel %vm1125, %v1199, 0.0
  %1282 = vadd.xlane.f32.xlu0 %v1281
  %v1283 = vpop.xlane.xlu0 %1282
  %v1284 = vsel %vm1125, %v1200, 0.0
  %1285 = vadd.xlane.f32.xlu0 %v1284
  %v1286 = vpop.xlane.xlu0 %1285
  %v1287 = vsel %vm1125, %v1201, 0.0
  %1288 = vadd.xlane.f32.xlu0 %v1287
  %v1289 = vpop.xlane.xlu0 %1288
  %v1290 = vsel %vm1125, %v1202, 0.0
  %1291 = vadd.xlane.f32.xlu0 %v1290
  %v1292 = vpop.xlane.xlu0 %1291
  %v1293 = vsel %vm1125, %v1203, 0.0
  %1294 = vadd.xlane.f32.xlu0 %v1293
  %v1295 = vpop.xlane.xlu0 %1294
  %v1296 = vsel %vm1125, %v1204, 0.0
  %1297 = vadd.xlane.f32.xlu0 %v1296
  %v1298 = vpop.xlane.xlu0 %1297
  %v1299 = vsel %vm1125, %v1205, 0.0
  %1300 = vadd.xlane.f32.xlu0 %v1299
  %v1301 = vpop.xlane.xlu0 %1300
  %v1302 = vsel %vm1125, %v1206, 0.0
  %1303 = vadd.xlane.f32.xlu0 %v1302
  %v1304 = vpop.xlane.xlu0 %1303
  %v1305 = vsel %vm1125, %v1207, 0.0
  %1306 = vadd.xlane.f32.xlu0 %v1305
  %v1307 = vpop.xlane.xlu0 %1306
  %v1308 = vsel %vm1125, %v1208, 0.0
  %1309 = vadd.xlane.f32.xlu0 %v1308
  %v1310 = vpop.xlane.xlu0 %1309
  %v1311 = vsel %vm1125, %v1209, 0.0
  %1312 = vadd.xlane.f32.xlu0 %v1311
  %v1313 = vpop.xlane.xlu0 %1312
  %v1314 = vsel %vm1125, %v1210, 0.0
  %1315 = vadd.xlane.f32.xlu0 %v1314
  %v1316 = vpop.xlane.xlu0 %1315
  %v1317 = vsel %vm1125, %v1211, 0.0
  %1318 = vadd.xlane.f32.xlu0 %v1317
  %v1319 = vpop.xlane.xlu0 %1318
  %v1320 = vsel %vm1125, %v1212, 0.0
  %1321 = vadd.xlane.f32.xlu0 %v1320
  %v1322 = vpop.xlane.xlu0 %1321
  %v1323 = vsel %vm1125, %v1213, 0.0
  %1324 = vadd.xlane.f32.xlu0 %v1323
  %v1325 = vpop.xlane.xlu0 %1324
  %v1326 = vsel %vm1125, %v1214, 0.0
  %1327 = vadd.xlane.f32.xlu0 %v1326
  %v1328 = vpop.xlane.xlu0 %1327
  %v1329 = vsel %vm1125, %v1215, 0.0
  %1330 = vadd.xlane.f32.xlu0 %v1329
  %v1331 = vpop.xlane.xlu0 %1330
  %v1332 = vsel %vm1125, %v1216, 0.0
  %1333 = vadd.xlane.f32.xlu0 %v1332
  %v1334 = vpop.xlane.xlu0 %1333
  %v1335 = vsel %vm1125, %v1217, 0.0
  %1336 = vadd.xlane.f32.xlu0 %v1335
  %v1337 = vpop.xlane.xlu0 %1336
  %v1338 = vsel %vm1125, %v1218, 0.0
  %1339 = vadd.xlane.f32.xlu0 %v1338
  %v1340 = vpop.xlane.xlu0 %1339
  %v1341 = vsel %vm1125, %v1219, 0.0
  %1342 = vadd.xlane.f32.xlu0 %v1341
  %v1343 = vpop.xlane.xlu0 %1342
  %v1344 = vsel %vm1125, %v1220, 0.0
  %1345 = vadd.xlane.f32.xlu0 %v1344
  %v1346 = vpop.xlane.xlu0 %1345
  %v1347 = vsel %vm1125, %v1221, 0.0
  %1348 = vadd.xlane.f32.xlu0 %v1347
  %v1349 = vpop.xlane.xlu0 %1348
  %v1350 = vsel %vm1125, %v1222, 0.0
  %1351 = vadd.xlane.f32.xlu0 %v1350
  %v1352 = vpop.xlane.xlu0 %1351
  %v1353 = vsel %vm1125, %v1223, 0.0
  %1354 = vadd.xlane.f32.xlu0 %v1353
  %v1355 = vpop.xlane.xlu0 %1354
  %v1356 = vsel %vm1125, %v1224, 0.0
  %1357 = vadd.xlane.f32.xlu0 %v1356
  %v1358 = vpop.xlane.xlu0 %1357
  %v1359 = vsel %vm1125, %v1225, 0.0
  %1360 = vadd.xlane.f32.xlu0 %v1359
  %v1361 = vpop.xlane.xlu0 %1360
  %v1362 = vsel %vm1125, %v1226, 0.0
  %1363 = vadd.xlane.f32.xlu0 %v1362
  %v1364 = vpop.xlane.xlu0 %1363
  %v1365 = vsel %vm1125, %v1227, 0.0
  %1366 = vadd.xlane.f32.xlu0 %v1365
  %v1367 = vpop.xlane.xlu0 %1366
  %v1368 = vsel %vm1125, %v1228, 0.0
  %1369 = vadd.xlane.f32.xlu0 %v1368
  %v1370 = vpop.xlane.xlu0 %1369
  %v1371 = vsel %vm1125, %v1229, 0.0
  %1372 = vadd.xlane.f32.xlu0 %v1371
  %v1373 = vpop.xlane.xlu0 %1372
  %v1374 = vsel %vm1125, %v1230, 0.0
  %1375 = vadd.xlane.f32.xlu0 %v1374
  %v1376 = vpop.xlane.xlu0 %1375
  %v1377 = vsel %vm1125, %v1231, 0.0
  %1378 = vadd.xlane.f32.xlu0 %v1377
  %v1379 = vpop.xlane.xlu0 %1378
  %v1380 = vsel %vm1125, %v1232, 0.0
  %1381 = vadd.xlane.f32.xlu0 %v1380
  %v1382 = vpop.xlane.xlu0 %1381
  %v1383 = vsel %vm1125, %v1233, 0.0
  %1384 = vadd.xlane.f32.xlu0 %v1383
  %v1385 = vpop.xlane.xlu0 %1384
  %v1386 = vsel %vm1125, %v1234, 0.0
  %1387 = vadd.xlane.f32.xlu0 %v1386
  %v1388 = vpop.xlane.xlu0 %1387
  %v1389 = vsel %vm1125, %v1235, 0.0
  %1390 = vadd.xlane.f32.xlu0 %v1389
  %v1391 = vpop.xlane.xlu0 %1390
  %v1392 = vsel %vm1125, %v1236, 0.0
  %1393 = vadd.xlane.f32.xlu0 %v1392
  %v1394 = vpop.xlane.xlu0 %1393
  %v1395 = vsel %vm1125, %v1237, 0.0
  %1396 = vadd.xlane.f32.xlu0 %v1395
  %v1397 = vpop.xlane.xlu0 %1396
  %v1398 = vsel %vm1125, %v1238, 0.0
  %1399 = vadd.xlane.f32.xlu0 %v1398
  %v1400 = vpop.xlane.xlu0 %1399
  %v1401 = vsel %vm1125, %v1239, 0.0
  %1402 = vadd.xlane.f32.xlu0 %v1401
  %v1403 = vpop.xlane.xlu0 %1402
  %v1404 = vsel %vm1125, %v1240, 0.0
  %1405 = vadd.xlane.f32.xlu0 %v1404
  %v1406 = vpop.xlane.xlu0 %1405
  %v1407 = vsel %vm1125, %v1241, 0.0
  %1408 = vadd.xlane.f32.xlu0 %v1407
  %v1409 = vpop.xlane.xlu0 %1408
  %v1410 = vsel %vm1125, %v1242, 0.0
  %1411 = vadd.xlane.f32.xlu0 %v1410
  %v1412 = vpop.xlane.xlu0 %1411
  %v1413 = vsel %vm1125, %v1243, 0.0
  %1414 = vadd.xlane.f32.xlu0 %v1413
  %v1415 = vpop.xlane.xlu0 %1414
  %v1416 = vsel %vm1125, %v1244, 0.0
  %1417 = vadd.xlane.f32.xlu0 %v1416
  %v1418 = vpop.xlane.xlu0 %1417
  %v1419 = vsel %vm1125, %v1245, 0.0
  %1420 = vadd.xlane.f32.xlu0 %v1419
  %v1421 = vpop.xlane.xlu0 %1420
  %v1422 = vsel %vm1125, %v1246, 0.0
  %1423 = vadd.xlane.f32.xlu0 %v1422
  %v1424 = vpop.xlane.xlu0 %1423
  %v1425 = vsel %vm1125, %v1247, 0.0
  %1426 = vadd.xlane.f32.xlu0 %v1425
  %v1427 = vpop.xlane.xlu0 %1426
  %v1428 = vsel %vm1125, %v1248, 0.0
  %1429 = vadd.xlane.f32.xlu0 %v1428
  %v1430 = vpop.xlane.xlu0 %1429
  %v1431 = vsel %vm1125, %v1249, 0.0
  %1432 = vadd.xlane.f32.xlu0 %v1431
  %v1433 = vpop.xlane.xlu0 %1432
  %v1434 = vsel %vm1125, %v1250, 0.0
  %1435 = vadd.xlane.f32.xlu0 %v1434
  %v1436 = vpop.xlane.xlu0 %1435
  %v1437 = vsel %vm1125, %v1251, 0.0
  %1438 = vadd.xlane.f32.xlu0 %v1437
  %v1439 = vpop.xlane.xlu0 %1438
  %v1440 = vsel %vm1125, %v1252, 0.0
  %1441 = vadd.xlane.f32.xlu0 %v1440
  %v1442 = vpop.xlane.xlu0 %1441
  %v1443 = vsel %vm1125, %v1253, 0.0
  %1444 = vadd.xlane.f32.xlu0 %v1443
  %v1445 = vpop.xlane.xlu0 %1444
  %v1446 = vsel %vm1125, %v1254, 0.0
  %1447 = vadd.xlane.f32.xlu0 %v1446
  %v1448 = vpop.xlane.xlu0 %1447
  %v1449 = vsel %vm1125, %v1255, 0.0
  %1450 = vadd.xlane.f32.xlu0 %v1449
  %v1451 = vpop.xlane.xlu0 %1450
  %v1516 = vlaneseq
  %v1517 = vand.u32 %v1516, 127
  %v1518 = vperm.slane %v1262, %v1517
  %v1519 = vadd.s32 %v1517, 4294967288
  %v1520 = vperm.slane %v1265, %v1519
  %vm1521 = vcmask 130112
  %v1522 = vsel %vm1521, %v1520, %v1518
  %v1523 = vperm.slane %v1268, %v1517
  %v1524 = vperm.slane %v1271, %v1519
  %v1525 = vsel %vm1521, %v1524, %v1523
  %v1526 = vperm.slane %v1274, %v1517
  %v1527 = vperm.slane %v1277, %v1519
  %v1528 = vsel %vm1521, %v1527, %v1526
  %v1529 = vperm.slane %v1280, %v1517
  %v1530 = vperm.slane %v1283, %v1519
  %v1531 = vsel %vm1521, %v1530, %v1529
  %v1532 = vperm.slane %v1286, %v1517
  %v1533 = vperm.slane %v1289, %v1519
  %v1534 = vsel %vm1521, %v1533, %v1532
  %v1535 = vperm.slane %v1292, %v1517
  %v1536 = vperm.slane %v1295, %v1519
  %v1537 = vsel %vm1521, %v1536, %v1535
  %v1538 = vperm.slane %v1298, %v1517
  %v1539 = vperm.slane %v1301, %v1519
  %v1540 = vsel %vm1521, %v1539, %v1538
  %v1541 = vperm.slane %v1304, %v1517
  %v1542 = vperm.slane %v1307, %v1519
  %v1543 = vsel %vm1521, %v1542, %v1541
  %v1544 = vperm.slane %v1310, %v1517
  %v1545 = vperm.slane %v1313, %v1519
  %v1546 = vsel %vm1521, %v1545, %v1544
  %v1547 = vperm.slane %v1316, %v1517
  %v1548 = vperm.slane %v1319, %v1519
  %v1549 = vsel %vm1521, %v1548, %v1547
  %v1550 = vperm.slane %v1322, %v1517
  %v1551 = vperm.slane %v1325, %v1519
  %v1552 = vsel %vm1521, %v1551, %v1550
  %v1553 = vperm.slane %v1328, %v1517
  %v1554 = vperm.slane %v1331, %v1519
  %v1555 = vsel %vm1521, %v1554, %v1553
  %v1556 = vperm.slane %v1334, %v1517
  %v1557 = vperm.slane %v1337, %v1519
  %v1558 = vsel %vm1521, %v1557, %v1556
  %v1559 = vperm.slane %v1340, %v1517
  %v1560 = vperm.slane %v1343, %v1519
  %v1561 = vsel %vm1521, %v1560, %v1559
  %v1562 = vperm.slane %v1346, %v1517
  %v1563 = vperm.slane %v1349, %v1519
  %v1564 = vsel %vm1521, %v1563, %v1562
  %v1565 = vperm.slane %v1352, %v1517
  %v1566 = vperm.slane %v1355, %v1519
  %v1567 = vsel %vm1521, %v1566, %v1565
  %v1568 = vperm.slane %v1358, %v1517
  %v1569 = vperm.slane %v1361, %v1519
  %v1570 = vsel %vm1521, %v1569, %v1568
  %v1571 = vperm.slane %v1364, %v1517
  %v1572 = vperm.slane %v1367, %v1519
  %v1573 = vsel %vm1521, %v1572, %v1571
  %v1574 = vperm.slane %v1370, %v1517
  %v1575 = vperm.slane %v1373, %v1519
  %v1576 = vsel %vm1521, %v1575, %v1574
  %v1577 = vperm.slane %v1376, %v1517
  %v1578 = vperm.slane %v1379, %v1519
  %v1579 = vsel %vm1521, %v1578, %v1577
  %v1580 = vperm.slane %v1382, %v1517
  %v1581 = vperm.slane %v1385, %v1519
  %v1582 = vsel %vm1521, %v1581, %v1580
  %v1583 = vperm.slane %v1388, %v1517
  %v1584 = vperm.slane %v1391, %v1519
  %v1585 = vsel %vm1521, %v1584, %v1583
  %v1586 = vperm.slane %v1394, %v1517
  %v1587 = vperm.slane %v1397, %v1519
  %v1588 = vsel %vm1521, %v1587, %v1586
  %v1589 = vperm.slane %v1400, %v1517
  %v1590 = vperm.slane %v1403, %v1519
  %v1591 = vsel %vm1521, %v1590, %v1589
  %v1592 = vperm.slane %v1406, %v1517
  %v1593 = vperm.slane %v1409, %v1519
  %v1594 = vsel %vm1521, %v1593, %v1592
  %v1595 = vperm.slane %v1412, %v1517
  %v1596 = vperm.slane %v1415, %v1519
  %v1597 = vsel %vm1521, %v1596, %v1595
  %v1598 = vperm.slane %v1418, %v1517
  %v1599 = vperm.slane %v1421, %v1519
  %v1600 = vsel %vm1521, %v1599, %v1598
  %v1601 = vperm.slane %v1424, %v1517
  %v1602 = vperm.slane %v1427, %v1519
  %v1603 = vsel %vm1521, %v1602, %v1601
  %v1604 = vperm.slane %v1430, %v1517
  %v1605 = vperm.slane %v1433, %v1519
  %v1606 = vsel %vm1521, %v1605, %v1604
  %v1607 = vperm.slane %v1436, %v1517
  %v1608 = vperm.slane %v1439, %v1519
  %v1609 = vsel %vm1521, %v1608, %v1607
  %v1610 = vperm.slane %v1442, %v1517
  %v1611 = vperm.slane %v1445, %v1519
  %v1612 = vsel %vm1521, %v1611, %v1610
  %v1613 = vperm.slane %v1448, %v1517
  %v1614 = vperm.slane %v1451, %v1519
  %v1615 = vsel %vm1521, %v1614, %v1613
  %vm1616 = vcmask 1041409
  %v1617 = vsel %vm1616, %v1525, %v1522
  %vm1618 = vcmask 1042434
  %v1619 = vsel %vm1618, %v1528, %v1617
  %vm1620 = vcmask 1043459
  %v1621 = vsel %vm1620, %v1531, %v1619
  %vm1622 = vcmask 1044484
  %v1623 = vsel %vm1622, %v1534, %v1621
  %vm1624 = vcmask 1045509
  %v1625 = vsel %vm1624, %v1537, %v1623
  %vm1626 = vcmask 1046534
  %v1627 = vsel %vm1626, %v1540, %v1625
  %vm1628 = vcmask 1047559
  %v1629 = vsel %vm1628, %v1543, %v1627
  %v1630 = vsel %vm1616, %v1549, %v1546
  %v1631 = vsel %vm1618, %v1552, %v1630
  %v1632 = vsel %vm1620, %v1555, %v1631
  %v1633 = vsel %vm1622, %v1558, %v1632
  %v1634 = vsel %vm1624, %v1561, %v1633
  %v1635 = vsel %vm1626, %v1564, %v1634
  %v1636 = vsel %vm1628, %v1567, %v1635
  %v1637 = vsel %vm1616, %v1573, %v1570
  %v1638 = vsel %vm1618, %v1576, %v1637
  %v1639 = vsel %vm1620, %v1579, %v1638
  %v1640 = vsel %vm1622, %v1582, %v1639
  %v1641 = vsel %vm1624, %v1585, %v1640
  %v1642 = vsel %vm1626, %v1588, %v1641
  %v1643 = vsel %vm1628, %v1591, %v1642
  %v1644 = vsel %vm1616, %v1597, %v1594
  %v1645 = vsel %vm1618, %v1600, %v1644
  %v1646 = vsel %vm1620, %v1603, %v1645
  %v1647 = vsel %vm1622, %v1606, %v1646
  %v1648 = vsel %vm1624, %v1609, %v1647
  %v1649 = vsel %vm1626, %v1612, %v1648
  %v1650 = vsel %vm1628, %v1615, %v1649
  %v1655 = vsel %vm1125, %v1629, 0.0
  %1656 = vadd.xlane.f32.xlu0 %v1655
  %v1657 = vpop.xlane.xlu0 %1656
  %v1658 = vsel %vm1125, %v1636, 0.0
  %1659 = vadd.xlane.f32.xlu0 %v1658
  %v1660 = vpop.xlane.xlu0 %1659
  %v1661 = vsel %vm1125, %v1643, 0.0
  %1662 = vadd.xlane.f32.xlu0 %v1661
  %v1663 = vpop.xlane.xlu0 %1662
  %v1664 = vsel %vm1125, %v1650, 0.0
  %1665 = vadd.xlane.f32.xlu0 %v1664
  %v1666 = vpop.xlane.xlu0 %1665
  %v1667 = vadd.f32 %v1256, %v1657
  %v1668 = vadd.f32 %v1257, %v1660
  %v1669 = vadd.f32 %v1258, %v1663
  %v1670 = vadd.f32 %v1259, %v1666
  %vm1671 = vcmask 7168
  %1672 = vst.msk [vmem:[%s12] sm:$0xff] %vm1671, %v1667
  %1673 = vst.msk [vmem:[%s12 + $0x8] sm:$0xff] %vm1671, %v1668
  %1674 = vst.msk [vmem:[%s12 + $0x10] sm:$0xff] %vm1671, %v1669
  %1675 = vst.msk [vmem:[%s12 + $0x18] sm:$0xff] %vm1671, %v1670
  // Predicated region
  $region42: #{feature_extractor_forward.1} parent=0 // pred_check
    _
  $region43: #{feature_extractor_forward.1} parent=0 // pred_check_branch
    %1677 = sbr.rel (0) target = $region45
  $region44: #{feature_extractor_forward.1} parent=0 // pred_region
    _
  $region45: #{feature_extractor_forward.1} parent=0 // pred_fallthru
    _
  // Predicated region
  $region46: #{feature_extractor_forward.1} parent=0 // pred_check
    _
  $region47: #{feature_extractor_forward.1} parent=0 // pred_check_branch
    %1679 = sbr.rel (0) target = $region49
  $region48: #{feature_extractor_forward.1} parent=0 // pred_region
    _
  $region49: #{feature_extractor_forward.1} parent=0 // pred_fallthru
    _
  // Predicated region
  $region50: #{feature_extractor_forward.1} parent=0 // pred_check
    _
  $region51: #{feature_extractor_forward.1} parent=0 // pred_check_branch
    %1681 = sbr.rel (0) target = $region53
  $region52: #{feature_extractor_forward.1} parent=0 // pred_region
    _
  $region53: #{feature_extractor_forward.1} parent=0 // pred_fallthru
    _
  // Predicated region
  $region54: #{feature_extractor_forward.1} parent=0 // pred_check
    _
  $region55: #{feature_extractor_forward.1} parent=0 // pred_check_branch
    %1683 = sbr.rel (0) target = $region57
  $region56: #{feature_extractor_forward.1} parent=0 // pred_region
    _
  $region57: #{feature_extractor_forward.1} parent=0 // pred_fallthru
    _
  // Predicated region
  $region58: #{feature_extractor_forward.1} parent=0 // pred_check
    _
  $region59: #{feature_extractor_forward.1} parent=0 // pred_check_branch
    %1685 = sbr.rel (0) target = $region61
  $region60: #{feature_extractor_forward.1} parent=0 // pred_region
    _
  $region61: #{feature_extractor_forward.1} parent=0 // pred_fallthru
    _
  // Predicated region
  $region62: #{feature_extractor_forward.1} parent=0 // pred_check
    _
  $region63: #{feature_extractor_forward.1} parent=0 // pred_check_branch
    %1687 = sbr.rel (0) target = $region65
  $region64: #{feature_extractor_forward.1} parent=0 // pred_region
    _
  $region65: #{feature_extractor_forward.1} parent=0 // pred_fallthru
    _

</llo_original>
